<compile_context>
chip_gen: v6e
topology: v6e:2x2x1
jax: 0.10.0
libtpu: 0.0.40
codegen_flags: <defaults>
</compile_context>

<pallas_src>
import functools

import jax
import jax.numpy as jnp
from jax.experimental import pallas as pl
from jax.experimental.pallas import tpu as pltpu


def _round_up(x, m):
    return ((x + m - 1) // m) * m


def bilstm_kernel(emb_ref, wih_ref, whh_ref, b_ref,
                  w1s_ref, w1m_ref, b1_ref, w2_ref, b2_ref,
                  out_ref, *scratch, hidden_size, full_unroll):
    """Fused bidirectional LSTM recurrence + online pooling + dense head.

    Gate column layout (built in the wrapper): [i_f i_b | f_f f_b | g_f g_b | o_f o_b]
    so both directions share one MXU matmul against the block-diagonal Whh and,
    for H >= 64, every gate slice lands on a 128-lane boundary.
    """
    H = hidden_size
    T, BB, E = emb_ref.shape
    G = 8 * H

    # ---- hoisted input projection: one MXU matmul for the whole sequence ----
    x_flat = emb_ref[...].reshape(T * BB, E)
    xw = (jnp.dot(x_flat, wih_ref[...], preferred_element_type=jnp.float32)
          + b_ref[...]).reshape(T, BB, G)

    # lane mask selecting the forward half of every 2H gate block (hoisted once)
    lane = jax.lax.broadcasted_iota(jnp.int32, (BB, G), 1)
    fwd_lanes = (lane % (2 * H)) < H

    whh = whh_ref[...]                               # (2H, 8H), block-diagonal
    # TODO(synk): for H >= 128, split into per-direction (H, 4H) matmuls to stop
    # streaming the zero half of the block-diagonal Whh through the MXU.

    def lstm_cell(gates, h, c, acc_sum, acc_max):
        # EUP work only where needed: sigmoid on i/f lanes [0,4H) and o lanes
        # [6H,8H), tanh on the g block [4H,6H).  No full-tile select.
        if_g = jax.nn.sigmoid(gates[:, :4 * H])
        g_g = jnp.tanh(gates[:, 4 * H:6 * H])
        o_g = jax.nn.sigmoid(gates[:, 6 * H:8 * H])
        i_g = if_g[:, :2 * H]
        f_g = if_g[:, 2 * H:4 * H]
        c = f_g * c + i_g * g_g
        h = o_g * jnp.tanh(c)
        return h, c, acc_sum + h, jnp.maximum(acc_max, h)

    zeros = jnp.zeros((BB, 2 * H), jnp.float32)
    init = (zeros, zeros, zeros, jnp.full((BB, 2 * H), -jnp.inf, jnp.float32))

    if full_unroll:
        # Small T: no scratch round trip.  The per-step fwd/bwd blend does not
        # depend on h/c, so it sits off the serial recurrence chain.
        xw_steps = [jnp.where(fwd_lanes, xw[t], xw[T - 1 - t]) for t in range(T)]
        h, c, acc_sum, acc_max = init
        for t in range(T):
            gates = xw_steps[t] + jnp.dot(h, whh, preferred_element_type=jnp.float32)
            h, c, acc_sum, acc_max = lstm_cell(gates, h, c, acc_sum, acc_max)
    else:
        # Large T: a single vectorized store into the xw scratch (no per-t
        # vst/vld prepass), partial unroll keeps vreg pressure bounded.
        xw_ref = scratch[0]
        xw_ref[...] = xw

        def step(k, carry):
            h, c, acc_sum, acc_max = carry
            xw_t = jnp.where(fwd_lanes, xw_ref[k], xw_ref[T - 1 - k])
            gates = xw_t + jnp.dot(h, whh, preferred_element_type=jnp.float32)
            return lstm_cell(gates, h, c, acc_sum, acc_max)

        _, _, acc_sum, acc_max = jax.lax.fori_loop(0, T, step, init, unroll=4)

    # ---- dense head ----
    # mean/max over time are order-invariant, so the online accumulators already
    # hold the pooled [fwd | bwd] features.  The 1/T mean scale is folded into
    # w1s in the wrapper and the (mean || max) concat is replaced by two dots
    # against the row halves of W1 summed together (no lane concat in-kernel).
    h1 = (jnp.dot(acc_sum, w1s_ref[...], preferred_element_type=jnp.float32)
          + jnp.dot(acc_max, w1m_ref[...], preferred_element_type=jnp.float32)
          + b1_ref[...])
    h1 = jnp.maximum(h1, 0.0)                                   # ReLU
    # nn.Dropout is identity in eval / inference mode.
    out_ref[...] = (jnp.dot(h1, w2_ref[...], preferred_element_type=jnp.float32)
                    + b2_ref[...])


def bilstm_forward(emb_tbe, params):
    T, B, E = emb_tbe.shape
    H = params["hidden_size"]
    O = params["b2"].shape[-1]

    # ---- batch tile: fill the MXU M dimension (<=128) but keep >= 2 grid tiles
    # when the batch allows so both v7x TensorCores get work.
    B8 = _round_up(B, 8)
    if B8 >= 16:
        BB = max(8, min(128, (B8 // 2) // 8 * 8))
    else:
        BB = 8

    full_unroll = T <= 32
    # VMEM guard for the whole-sequence xw scratch (64 MiB physical on v7x).
    # TODO(synk): for very long T, chunk the time axis (carry h/c/acc in scratch)
    # instead of shrinking BB so the MXU M-dim stays full.
    while (not full_unroll) and BB > 8 and T * BB * 8 * H * 4 > 24 * 2**20:
        BB = max(8, (BB // 2) // 8 * 8)

    B_pad = _round_up(B8, BB)
    if B_pad != B:
        emb_tbe = jnp.pad(emb_tbe, ((0, 0), (0, B_pad - B), (0, 0)))

    # Head weight transforms (one-time, wrapper side, weight-side not input-side):
    # fold the 1/T mean scaling into the sum-rows of W1 and split W1 so the
    # kernel never builds the (mean || max) concatenation.
    w1s = params["w1t"][:2 * H] * (1.0 / T)          # (2H, H)
    w1m = params["w1t"][2 * H:]                      # (2H, H)

    scratch_shapes = [] if full_unroll else [pltpu.VMEM((T, BB, 8 * H), jnp.float32)]

    # crude VMEM estimate -> explicit scoped limit (defaults are only 16/32 MiB)
    f32 = 4
    weight_bytes = (E * 8 * H + 2 * H * 8 * H + 8 * H
                    + 2 * (2 * H * H) + H + H * O + O) * f32
    est = (2 * T * BB * E * f32 + 2 * BB * O * f32 + 2 * weight_bytes
           + 2 * T * BB * 8 * H * f32
           + (0 if full_unroll else T * BB * 8 * H * f32))
    vmem_limit = int(min(64 * 2**20, max(32 * 2**20, 2 * est)))

    kernel = functools.partial(bilstm_kernel, hidden_size=H, full_unroll=full_unroll)
    # TODO(synk): at large E/H/T, cast matmul operands to bf16 (f32 accumulation)
    # for the MXU fast path; kept f32 here to match the f32 PyTorch module closely.
    out = pl.pallas_call(
        kernel,
        out_shape=jax.ShapeDtypeStruct((B_pad, O), jnp.float32),
        grid=(B_pad // BB,),
        in_specs=[
            pl.BlockSpec((T, BB, E), lambda b: (0, b, 0)),        # emb, batch-tiled
            pl.BlockSpec((E, 8 * H), lambda b: (0, 0)),           # fused wih
            pl.BlockSpec((2 * H, 8 * H), lambda b: (0, 0)),       # block-diag whh
            pl.BlockSpec((1, 8 * H), lambda b: (0, 0)),           # fused bias
            pl.BlockSpec((2 * H, H), lambda b: (0, 0)),           # w1 sum-half (1/T folded)
            pl.BlockSpec((2 * H, H), lambda b: (0, 0)),           # w1 max-half
            pl.BlockSpec((1, H), lambda b: (0, 0)),               # b1
            pl.BlockSpec((H, O), lambda b: (0, 0)),               # w2t
            pl.BlockSpec((1, O), lambda b: (0, 0)),               # b2
        ],
        out_specs=pl.BlockSpec((BB, O), lambda b: (b, 0)),
        scratch_shapes=scratch_shapes,
        compiler_params=pltpu.CompilerParams(
            dimension_semantics=("parallel",),
            vmem_limit_bytes=vmem_limit),
    )(emb_tbe,
      params["wih_comb"], params["whh_comb"], params["b_comb"],
      w1s, w1m, params["b1"], params["w2t"], params["b2"])
    return out[:B]


def build_fused_params(raw, hidden_size):
    """Wrapper-side weight fusion: column order [i_f i_b | f_f f_b | g_f g_b | o_f o_b]."""
    H = hidden_size
    wih_f, wih_b = raw["w_ih_f"].T, raw["w_ih_b"].T      # (E, 4H), torch order [i|f|g|o]
    whh_f, whh_b = raw["w_hh_f"].T, raw["w_hh_b"].T      # (H, 4H)
    b_f = raw["b_ih_f"] + raw["b_hh_f"]                  # (4H,)
    b_b = raw["b_ih_b"] + raw["b_hh_b"]

    zeros_h = jnp.zeros((H, H), jnp.float32)
    wih_cols, whh_cols, b_cols = [], [], []
    for g in range(4):
        sl = slice(g * H, (g + 1) * H)
        wih_cols += [wih_f[:, sl], wih_b[:, sl]]
        whh_cols += [jnp.concatenate([whh_f[:, sl], zeros_h], axis=0),
                     jnp.concatenate([zeros_h, whh_b[:, sl]], axis=0)]
        b_cols += [b_f[sl], b_b[sl]]

    return {
        "hidden_size": H,
        "wih_comb": jnp.concatenate(wih_cols, axis=1),          # (E, 8H)
        "whh_comb": jnp.concatenate(whh_cols, axis=1),          # (2H, 8H) block-diag
        "b_comb": jnp.concatenate(b_cols).reshape(1, 8 * H),    # (1, 8H)
        "w1t": raw["w1"].T,                                     # (4H, H)
        "b1": raw["b1"].reshape(1, H),
        "w2t": raw["w2"].T,                                     # (H, O)
        "b2": raw["b2"].reshape(1, -1),
    }


def reference_forward(emb_tbe, raw, hidden_size):
    """Pure-JAX reference reproducing the PyTorch forward (eval mode), f32 matmuls."""
    T, B, _ = emb_tbe.shape
    H = hidden_size

    def dotp(a, b):
        return jnp.dot(a, b, precision=jax.lax.Precision.HIGHEST)

    def run_dir(w_ih, w_hh, b_ih, b_hh, reverse):
        xs = emb_tbe[::-1] if reverse else emb_tbe

        def step(carry, x_t):
            h, c = carry
            gates = dotp(x_t, w_ih.T) + dotp(h, w_hh.T) + b_ih + b_hh
            i_g = jax.nn.sigmoid(gates[:, 0:H])
            f_g = jax.nn.sigmoid(gates[:, H:2 * H])
            g_g = jnp.tanh(gates[:, 2 * H:3 * H])
            o_g = jax.nn.sigmoid(gates[:, 3 * H:4 * H])
            c = f_g * c + i_g * g_g
            h = o_g * jnp.tanh(c)
            return (h, c), h

        init = (jnp.zeros((B, H)), jnp.zeros((B, H)))
        _, hs = jax.lax.scan(step, init, xs)
        return hs[::-1] if reverse else hs                       # (T, B, H), time order

    hs_f = run_dir(raw["w_ih_f"], raw["w_hh_f"], raw["b_ih_f"], raw["b_hh_f"], False)
    hs_b = run_dir(raw["w_ih_b"], raw["w_hh_b"], raw["b_ih_b"], raw["b_hh_b"], True)
    h_lstm = jnp.concatenate([hs_f, hs_b], axis=-1)              # (T, B, 2H)
    avg_pool = jnp.mean(h_lstm, axis=0)
    max_pool = jnp.max(h_lstm, axis=0)
    conc = jnp.concatenate([avg_pool, max_pool], axis=1)
    conc = jnp.maximum(dotp(conc, raw["w1"].T) + raw["b1"], 0.0)
    return dotp(conc, raw["w2"].T) + raw["b2"]


if __name__ == "__main__":
    key = jax.random.PRNGKey(0)

    B, T = 2, 8              # batch, sequence length
    V, E = 20, 32            # vocab size, embedding dim
    H = 64                   # hidden_size (module default -> 128-lane aligned gates)
    O = 4                    # out_features

    keys = jax.random.split(key, 14)

    # Pretrained-style embedding table + two average rows (as in the module).
    vocab_weights = jax.random.normal(keys[0], (V, E), jnp.float32) * 0.5
    ave_vec = jnp.mean(vocab_weights, axis=0, keepdims=True)
    vocab_weights = jnp.concatenate([vocab_weights, ave_vec, ave_vec], axis=0)  # (V+2, E)

    def uniform(k, shape, scale):
        return jax.random.uniform(k, shape, jnp.float32, -scale, scale)

    s_lstm = 1.0 / (H ** 0.5)
    s_lin = 1.0 / ((4 * H) ** 0.5)
    s_out = 1.0 / (H ** 0.5)

    raw = {
        # PyTorch-shaped LSTM params, gate order [i, f, g, o]
        "w_ih_f": uniform(keys[1], (4 * H, E), s_lstm),
        "w_hh_f": uniform(keys[2], (4 * H, H), s_lstm),
        "b_ih_f": uniform(keys[3], (4 * H,), s_lstm),
        "b_hh_f": uniform(keys[4], (4 * H,), s_lstm),
        "w_ih_b": uniform(keys[5], (4 * H, E), s_lstm),
        "w_hh_b": uniform(keys[6], (4 * H, H), s_lstm),
        "b_ih_b": uniform(keys[7], (4 * H,), s_lstm),
        "b_hh_b": uniform(keys[8], (4 * H,), s_lstm),
        # Linear(4H -> H) and out Linear(H -> O)
        "w1": uniform(keys[9], (H, 4 * H), s_lin),
        "b1": uniform(keys[10], (H,), s_lin),
        "w2": uniform(keys[11], (O, H), s_out),
        "b2": uniform(keys[12], (O,), s_out),
    }
    params = build_fused_params(raw, H)

    # Token ids (B, T) and embedding lookup (glue, plain-JAX gather).
    x_ids = jax.random.randint(keys[13], (B, T), 0, V + 2, jnp.int32)
    h_embedding = vocab_weights[x_ids]                            # (B, T, E)
    emb_tbe = jnp.transpose(h_embedding, (1, 0, 2))               # (T, B, E) time-major

    out = bilstm_forward(emb_tbe, params)
    out = jax.block_until_ready(out)

    ref = reference_forward(emb_tbe, raw, H)
    assert out.shape == (B, O)
    assert jnp.allclose(out, ref, atol=1e-3, rtol=1e-3), "mismatch vs JAX reference"

    print("KERNEL_OK")
</pallas_src>

<mosaic_0001>
module attributes {stable_mosaic.version = 11 : i64} {
  func.func @bilstm_kernel(%arg0: i32, %arg1: memref<8x8x32xf32, #tpu.memory_space<vmem>>, %arg2: memref<32x512xf32, #tpu.memory_space<vmem>>, %arg3: memref<128x512xf32, #tpu.memory_space<vmem>>, %arg4: memref<1x512xf32, #tpu.memory_space<vmem>>, %arg5: memref<128x64xf32, #tpu.memory_space<vmem>>, %arg6: memref<128x64xf32, #tpu.memory_space<vmem>>, %arg7: memref<1x64xf32, #tpu.memory_space<vmem>>, %arg8: memref<64x4xf32, #tpu.memory_space<vmem>>, %arg9: memref<1x4xf32, #tpu.memory_space<vmem>>, %arg10: memref<8x4xf32, #tpu.memory_space<vmem>>) attributes {dimension_semantics = [#tpu.dimension_semantics<parallel>], iteration_bounds = array<i64: 1>, scalar_prefetch = 0 : i64, scratch_operands = 0 : i64, tpu.core_type = #tpu.core_type<tc>, window_params = [{transform_indices = @transform_0, window_bounds = array<i64: 8, 8, 32>}, {pipeline_mode = #tpu.pipeline_mode<synchronous>, transform_indices = @transform_1, window_bounds = array<i64: 32, 512>}, {pipeline_mode = #tpu.pipeline_mode<synchronous>, transform_indices = @transform_2, window_bounds = array<i64: 128, 512>}, {pipeline_mode = #tpu.pipeline_mode<synchronous>, transform_indices = @transform_3, window_bounds = array<i64: 1, 512>}, {pipeline_mode = #tpu.pipeline_mode<synchronous>, transform_indices = @transform_4, window_bounds = array<i64: 128, 64>}, {pipeline_mode = #tpu.pipeline_mode<synchronous>, transform_indices = @transform_5, window_bounds = array<i64: 128, 64>}, {pipeline_mode = #tpu.pipeline_mode<synchronous>, transform_indices = @transform_6, window_bounds = array<i64: 1, 64>}, {pipeline_mode = #tpu.pipeline_mode<synchronous>, transform_indices = @transform_7, window_bounds = array<i64: 64, 4>}, {pipeline_mode = #tpu.pipeline_mode<synchronous>, transform_indices = @transform_8, window_bounds = array<i64: 1, 4>}, {transform_indices = @transform_9, window_bounds = array<i64: 8, 4>}]} {
    %c0 = arith.constant 0 : index
    %c0_0 = arith.constant 0 : index
    %c0_1 = arith.constant 0 : index
    %0 = vector.load %arg1[%c0, %c0_0, %c0_1] : memref<8x8x32xf32, #tpu.memory_space<vmem>>, vector<8x8x32xf32>
    %1 = vector.shape_cast %0 : vector<8x8x32xf32> to vector<64x32xf32>
    %c0_2 = arith.constant 0 : index
    %c0_3 = arith.constant 0 : index
    %2 = vector.load %arg2[%c0_2, %c0_3] : memref<32x512xf32, #tpu.memory_space<vmem>>, vector<32x512xf32>
    %cst = arith.constant dense<0.000000e+00> : vector<64x512xf32>
    %3 = tpu.matmul %1, %2, %cst {dimension_numbers = #tpu.dot_dimension_numbers<[1], [0], [0], [1], [0, 0, 1, 1], [], []>} : vector<64x32xf32>, vector<32x512xf32>, vector<64x512xf32> -> vector<64x512xf32>
    %c0_4 = arith.constant 0 : index
    %c0_5 = arith.constant 0 : index
    %4 = vector.load %arg4[%c0_4, %c0_5] : memref<1x512xf32, #tpu.memory_space<vmem>>, vector<1x512xf32>
    %5 = vector.broadcast %4 : vector<1x512xf32> to vector<64x512xf32>
    %6 = arith.addf %3, %5 : vector<64x512xf32>
    %7 = vector.shape_cast %6 : vector<64x512xf32> to vector<8x8x512xf32>
    %8 = tpu.iota {dimensions = array<i32: 1>} : vector<8x512xi32>
    %c128_i32 = arith.constant 128 : i32
    %c0_i32 = arith.constant 0 : i32
    %9 = arith.cmpi eq, %c128_i32, %c0_i32 : i32
    %c1_i32 = arith.constant 1 : i32
    %10 = arith.select %9, %c1_i32, %c128_i32 : i32
    %11 = vector.broadcast %10 : i32 to vector<8x512xi32>
    %12 = arith.remsi %8, %11 : vector<8x512xi32>
    %c0_i32_6 = arith.constant 0 : i32
    %13 = vector.broadcast %c0_i32_6 : i32 to vector<8x512xi32>
    %14 = arith.cmpi ne, %12, %13 : vector<8x512xi32>
    %c0_i32_7 = arith.constant 0 : i32
    %15 = vector.broadcast %c0_i32_7 : i32 to vector<8x512xi32>
    %16 = arith.cmpi slt, %12, %15 : vector<8x512xi32>
    %c0_i32_8 = arith.constant 0 : i32
    %17 = arith.cmpi slt, %10, %c0_i32_8 : i32
    %18 = vector.broadcast %17 : i1 to vector<8x512xi1>
    %19 = vector.broadcast %18 : vector<8x512xi1> to vector<8x512xi1>
    %20 = arith.xori %16, %19 : vector<8x512xi1>
    %21 = arith.andi %20, %14 : vector<8x512xi1>
    %22 = vector.broadcast %10 : i32 to vector<8x512xi32>
    %23 = arith.addi %12, %22 : vector<8x512xi32>
    %24 = arith.select %21, %23, %12 : vector<8x512xi1>, vector<8x512xi32>
    %c64_i32 = arith.constant 64 : i32
    %25 = vector.broadcast %c64_i32 : i32 to vector<8x512xi32>
    %26 = arith.cmpi slt, %24, %25 : vector<8x512xi32>
    %c0_9 = arith.constant 0 : index
    %c0_10 = arith.constant 0 : index
    %27 = vector.load %arg3[%c0_9, %c0_10] : memref<128x512xf32, #tpu.memory_space<vmem>>, vector<128x512xf32>
    %cst_11 = arith.constant 0.000000e+00 : f32
    %28 = vector.broadcast %cst_11 : f32 to vector<8x128xf32>
    %cst_12 = arith.constant 0xFF800000 : f32
    %29 = vector.broadcast %cst_12 : f32 to vector<8x128xf32>
    %30 = vector.extract_strided_slice %7 {offsets = [0, 0, 0], sizes = [1, 8, 512], strides = [1, 1, 1]} : vector<8x8x512xf32> to vector<1x8x512xf32>
    %31 = vector.shape_cast %30 : vector<1x8x512xf32> to vector<8x512xf32>
    %32 = vector.extract_strided_slice %7 {offsets = [7, 0, 0], sizes = [1, 8, 512], strides = [1, 1, 1]} : vector<8x8x512xf32> to vector<1x8x512xf32>
    %33 = vector.shape_cast %32 : vector<1x8x512xf32> to vector<8x512xf32>
    %34 = arith.select %26, %31, %33 : vector<8x512xi1>, vector<8x512xf32>
    %35 = vector.extract_strided_slice %7 {offsets = [1, 0, 0], sizes = [1, 8, 512], strides = [1, 1, 1]} : vector<8x8x512xf32> to vector<1x8x512xf32>
    %36 = vector.shape_cast %35 : vector<1x8x512xf32> to vector<8x512xf32>
    %37 = vector.extract_strided_slice %7 {offsets = [6, 0, 0], sizes = [1, 8, 512], strides = [1, 1, 1]} : vector<8x8x512xf32> to vector<1x8x512xf32>
    %38 = vector.shape_cast %37 : vector<1x8x512xf32> to vector<8x512xf32>
    %39 = arith.select %26, %36, %38 : vector<8x512xi1>, vector<8x512xf32>
    %40 = vector.extract_strided_slice %7 {offsets = [2, 0, 0], sizes = [1, 8, 512], strides = [1, 1, 1]} : vector<8x8x512xf32> to vector<1x8x512xf32>
    %41 = vector.shape_cast %40 : vector<1x8x512xf32> to vector<8x512xf32>
    %42 = vector.extract_strided_slice %7 {offsets = [5, 0, 0], sizes = [1, 8, 512], strides = [1, 1, 1]} : vector<8x8x512xf32> to vector<1x8x512xf32>
    %43 = vector.shape_cast %42 : vector<1x8x512xf32> to vector<8x512xf32>
    %44 = arith.select %26, %41, %43 : vector<8x512xi1>, vector<8x512xf32>
    %45 = vector.extract_strided_slice %7 {offsets = [3, 0, 0], sizes = [1, 8, 512], strides = [1, 1, 1]} : vector<8x8x512xf32> to vector<1x8x512xf32>
    %46 = vector.shape_cast %45 : vector<1x8x512xf32> to vector<8x512xf32>
    %47 = vector.extract_strided_slice %7 {offsets = [4, 0, 0], sizes = [1, 8, 512], strides = [1, 1, 1]} : vector<8x8x512xf32> to vector<1x8x512xf32>
    %48 = vector.shape_cast %47 : vector<1x8x512xf32> to vector<8x512xf32>
    %49 = arith.select %26, %46, %48 : vector<8x512xi1>, vector<8x512xf32>
    %50 = vector.extract_strided_slice %7 {offsets = [4, 0, 0], sizes = [1, 8, 512], strides = [1, 1, 1]} : vector<8x8x512xf32> to vector<1x8x512xf32>
    %51 = vector.shape_cast %50 : vector<1x8x512xf32> to vector<8x512xf32>
    %52 = vector.extract_strided_slice %7 {offsets = [3, 0, 0], sizes = [1, 8, 512], strides = [1, 1, 1]} : vector<8x8x512xf32> to vector<1x8x512xf32>
    %53 = vector.shape_cast %52 : vector<1x8x512xf32> to vector<8x512xf32>
    %54 = arith.select %26, %51, %53 : vector<8x512xi1>, vector<8x512xf32>
    %55 = vector.extract_strided_slice %7 {offsets = [5, 0, 0], sizes = [1, 8, 512], strides = [1, 1, 1]} : vector<8x8x512xf32> to vector<1x8x512xf32>
    %56 = vector.shape_cast %55 : vector<1x8x512xf32> to vector<8x512xf32>
    %57 = vector.extract_strided_slice %7 {offsets = [2, 0, 0], sizes = [1, 8, 512], strides = [1, 1, 1]} : vector<8x8x512xf32> to vector<1x8x512xf32>
    %58 = vector.shape_cast %57 : vector<1x8x512xf32> to vector<8x512xf32>
    %59 = arith.select %26, %56, %58 : vector<8x512xi1>, vector<8x512xf32>
    %60 = vector.extract_strided_slice %7 {offsets = [6, 0, 0], sizes = [1, 8, 512], strides = [1, 1, 1]} : vector<8x8x512xf32> to vector<1x8x512xf32>
    %61 = vector.shape_cast %60 : vector<1x8x512xf32> to vector<8x512xf32>
    %62 = vector.extract_strided_slice %7 {offsets = [1, 0, 0], sizes = [1, 8, 512], strides = [1, 1, 1]} : vector<8x8x512xf32> to vector<1x8x512xf32>
    %63 = vector.shape_cast %62 : vector<1x8x512xf32> to vector<8x512xf32>
    %64 = arith.select %26, %61, %63 : vector<8x512xi1>, vector<8x512xf32>
    %65 = vector.extract_strided_slice %7 {offsets = [7, 0, 0], sizes = [1, 8, 512], strides = [1, 1, 1]} : vector<8x8x512xf32> to vector<1x8x512xf32>
    %66 = vector.shape_cast %65 : vector<1x8x512xf32> to vector<8x512xf32>
    %67 = vector.extract_strided_slice %7 {offsets = [0, 0, 0], sizes = [1, 8, 512], strides = [1, 1, 1]} : vector<8x8x512xf32> to vector<1x8x512xf32>
    %68 = vector.shape_cast %67 : vector<1x8x512xf32> to vector<8x512xf32>
    %69 = arith.select %26, %66, %68 : vector<8x512xi1>, vector<8x512xf32>
    %cst_13 = arith.constant dense<0.000000e+00> : vector<8x512xf32>
    %70 = tpu.matmul %28, %27, %cst_13 {dimension_numbers = #tpu.dot_dimension_numbers<[1], [0], [0], [1], [0, 0, 1, 1], [], []>} : vector<8x128xf32>, vector<128x512xf32>, vector<8x512xf32> -> vector<8x512xf32>
    %71 = arith.addf %34, %70 : vector<8x512xf32>
    %72 = vector.extract_strided_slice %71 {offsets = [0, 0], sizes = [8, 256], strides = [1, 1]} : vector<8x512xf32> to vector<8x256xf32>
    %73 = arith.negf %72 : vector<8x256xf32>
    %74 = math.exp %73 : vector<8x256xf32>
    %cst_14 = arith.constant 1.000000e+00 : f32
    %75 = vector.broadcast %cst_14 : f32 to vector<8x256xf32>
    %76 = arith.addf %75, %74 : vector<8x256xf32>
    %77 = arith.divf %75, %76 : vector<8x256xf32>
    %78 = vector.extract_strided_slice %71 {offsets = [0, 256], sizes = [8, 128], strides = [1, 1]} : vector<8x512xf32> to vector<8x128xf32>
    %79 = math.tanh %78 : vector<8x128xf32>
    %80 = vector.extract_strided_slice %71 {offsets = [0, 384], sizes = [8, 128], strides = [1, 1]} : vector<8x512xf32> to vector<8x128xf32>
    %81 = arith.negf %80 : vector<8x128xf32>
    %82 = math.exp %81 : vector<8x128xf32>
    %cst_15 = arith.constant 1.000000e+00 : f32
    %83 = vector.broadcast %cst_15 : f32 to vector<8x128xf32>
    %84 = arith.addf %83, %82 : vector<8x128xf32>
    %85 = arith.divf %83, %84 : vector<8x128xf32>
    %86 = vector.extract_strided_slice %77 {offsets = [0, 0], sizes = [8, 128], strides = [1, 1]} : vector<8x256xf32> to vector<8x128xf32>
    %87 = vector.extract_strided_slice %77 {offsets = [0, 128], sizes = [8, 128], strides = [1, 1]} : vector<8x256xf32> to vector<8x128xf32>
    %88 = arith.mulf %87, %28 : vector<8x128xf32>
    %89 = arith.mulf %86, %79 : vector<8x128xf32>
    %90 = arith.addf %88, %89 : vector<8x128xf32>
    %91 = math.tanh %90 : vector<8x128xf32>
    %92 = arith.mulf %85, %91 : vector<8x128xf32>
    %93 = arith.addf %28, %92 : vector<8x128xf32>
    %94 = arith.maximumf %29, %92 : vector<8x128xf32>
    %cst_16 = arith.constant dense<0.000000e+00> : vector<8x512xf32>
    %95 = tpu.matmul %92, %27, %cst_16 {dimension_numbers = #tpu.dot_dimension_numbers<[1], [0], [0], [1], [0, 0, 1, 1], [], []>} : vector<8x128xf32>, vector<128x512xf32>, vector<8x512xf32> -> vector<8x512xf32>
    %96 = arith.addf %39, %95 : vector<8x512xf32>
    %97 = vector.extract_strided_slice %96 {offsets = [0, 0], sizes = [8, 256], strides = [1, 1]} : vector<8x512xf32> to vector<8x256xf32>
    %98 = arith.negf %97 : vector<8x256xf32>
    %99 = math.exp %98 : vector<8x256xf32>
    %cst_17 = arith.constant 1.000000e+00 : f32
    %100 = vector.broadcast %cst_17 : f32 to vector<8x256xf32>
    %101 = arith.addf %100, %99 : vector<8x256xf32>
    %102 = arith.divf %100, %101 : vector<8x256xf32>
    %103 = vector.extract_strided_slice %96 {offsets = [0, 256], sizes = [8, 128], strides = [1, 1]} : vector<8x512xf32> to vector<8x128xf32>
    %104 = math.tanh %103 : vector<8x128xf32>
    %105 = vector.extract_strided_slice %96 {offsets = [0, 384], sizes = [8, 128], strides = [1, 1]} : vector<8x512xf32> to vector<8x128xf32>
    %106 = arith.negf %105 : vector<8x128xf32>
    %107 = math.exp %106 : vector<8x128xf32>
    %cst_18 = arith.constant 1.000000e+00 : f32
    %108 = vector.broadcast %cst_18 : f32 to vector<8x128xf32>
    %109 = arith.addf %108, %107 : vector<8x128xf32>
    %110 = arith.divf %108, %109 : vector<8x128xf32>
    %111 = vector.extract_strided_slice %102 {offsets = [0, 0], sizes = [8, 128], strides = [1, 1]} : vector<8x256xf32> to vector<8x128xf32>
    %112 = vector.extract_strided_slice %102 {offsets = [0, 128], sizes = [8, 128], strides = [1, 1]} : vector<8x256xf32> to vector<8x128xf32>
    %113 = arith.mulf %112, %90 : vector<8x128xf32>
    %114 = arith.mulf %111, %104 : vector<8x128xf32>
    %115 = arith.addf %113, %114 : vector<8x128xf32>
    %116 = math.tanh %115 : vector<8x128xf32>
    %117 = arith.mulf %110, %116 : vector<8x128xf32>
    %118 = arith.addf %93, %117 : vector<8x128xf32>
    %119 = arith.maximumf %94, %117 : vector<8x128xf32>
    %cst_19 = arith.constant dense<0.000000e+00> : vector<8x512xf32>
    %120 = tpu.matmul %117, %27, %cst_19 {dimension_numbers = #tpu.dot_dimension_numbers<[1], [0], [0], [1], [0, 0, 1, 1], [], []>} : vector<8x128xf32>, vector<128x512xf32>, vector<8x512xf32> -> vector<8x512xf32>
    %121 = arith.addf %44, %120 : vector<8x512xf32>
    %122 = vector.extract_strided_slice %121 {offsets = [0, 0], sizes = [8, 256], strides = [1, 1]} : vector<8x512xf32> to vector<8x256xf32>
    %123 = arith.negf %122 : vector<8x256xf32>
    %124 = math.exp %123 : vector<8x256xf32>
    %cst_20 = arith.constant 1.000000e+00 : f32
    %125 = vector.broadcast %cst_20 : f32 to vector<8x256xf32>
    %126 = arith.addf %125, %124 : vector<8x256xf32>
    %127 = arith.divf %125, %126 : vector<8x256xf32>
    %128 = vector.extract_strided_slice %121 {offsets = [0, 256], sizes = [8, 128], strides = [1, 1]} : vector<8x512xf32> to vector<8x128xf32>
    %129 = math.tanh %128 : vector<8x128xf32>
    %130 = vector.extract_strided_slice %121 {offsets = [0, 384], sizes = [8, 128], strides = [1, 1]} : vector<8x512xf32> to vector<8x128xf32>
    %131 = arith.negf %130 : vector<8x128xf32>
    %132 = math.exp %131 : vector<8x128xf32>
    %cst_21 = arith.constant 1.000000e+00 : f32
    %133 = vector.broadcast %cst_21 : f32 to vector<8x128xf32>
    %134 = arith.addf %133, %132 : vector<8x128xf32>
    %135 = arith.divf %133, %134 : vector<8x128xf32>
    %136 = vector.extract_strided_slice %127 {offsets = [0, 0], sizes = [8, 128], strides = [1, 1]} : vector<8x256xf32> to vector<8x128xf32>
    %137 = vector.extract_strided_slice %127 {offsets = [0, 128], sizes = [8, 128], strides = [1, 1]} : vector<8x256xf32> to vector<8x128xf32>
    %138 = arith.mulf %137, %115 : vector<8x128xf32>
    %139 = arith.mulf %136, %129 : vector<8x128xf32>
    %140 = arith.addf %138, %139 : vector<8x128xf32>
    %141 = math.tanh %140 : vector<8x128xf32>
    %142 = arith.mulf %135, %141 : vector<8x128xf32>
    %143 = arith.addf %118, %142 : vector<8x128xf32>
    %144 = arith.maximumf %119, %142 : vector<8x128xf32>
    %cst_22 = arith.constant dense<0.000000e+00> : vector<8x512xf32>
    %145 = tpu.matmul %142, %27, %cst_22 {dimension_numbers = #tpu.dot_dimension_numbers<[1], [0], [0], [1], [0, 0, 1, 1], [], []>} : vector<8x128xf32>, vector<128x512xf32>, vector<8x512xf32> -> vector<8x512xf32>
    %146 = arith.addf %49, %145 : vector<8x512xf32>
    %147 = vector.extract_strided_slice %146 {offsets = [0, 0], sizes = [8, 256], strides = [1, 1]} : vector<8x512xf32> to vector<8x256xf32>
    %148 = arith.negf %147 : vector<8x256xf32>
    %149 = math.exp %148 : vector<8x256xf32>
    %cst_23 = arith.constant 1.000000e+00 : f32
    %150 = vector.broadcast %cst_23 : f32 to vector<8x256xf32>
    %151 = arith.addf %150, %149 : vector<8x256xf32>
    %152 = arith.divf %150, %151 : vector<8x256xf32>
    %153 = vector.extract_strided_slice %146 {offsets = [0, 256], sizes = [8, 128], strides = [1, 1]} : vector<8x512xf32> to vector<8x128xf32>
    %154 = math.tanh %153 : vector<8x128xf32>
    %155 = vector.extract_strided_slice %146 {offsets = [0, 384], sizes = [8, 128], strides = [1, 1]} : vector<8x512xf32> to vector<8x128xf32>
    %156 = arith.negf %155 : vector<8x128xf32>
    %157 = math.exp %156 : vector<8x128xf32>
    %cst_24 = arith.constant 1.000000e+00 : f32
    %158 = vector.broadcast %cst_24 : f32 to vector<8x128xf32>
    %159 = arith.addf %158, %157 : vector<8x128xf32>
    %160 = arith.divf %158, %159 : vector<8x128xf32>
    %161 = vector.extract_strided_slice %152 {offsets = [0, 0], sizes = [8, 128], strides = [1, 1]} : vector<8x256xf32> to vector<8x128xf32>
    %162 = vector.extract_strided_slice %152 {offsets = [0, 128], sizes = [8, 128], strides = [1, 1]} : vector<8x256xf32> to vector<8x128xf32>
    %163 = arith.mulf %162, %140 : vector<8x128xf32>
    %164 = arith.mulf %161, %154 : vector<8x128xf32>
    %165 = arith.addf %163, %164 : vector<8x128xf32>
    %166 = math.tanh %165 : vector<8x128xf32>
    %167 = arith.mulf %160, %166 : vector<8x128xf32>
    %168 = arith.addf %143, %167 : vector<8x128xf32>
    %169 = arith.maximumf %144, %167 : vector<8x128xf32>
    %cst_25 = arith.constant dense<0.000000e+00> : vector<8x512xf32>
    %170 = tpu.matmul %167, %27, %cst_25 {dimension_numbers = #tpu.dot_dimension_numbers<[1], [0], [0], [1], [0, 0, 1, 1], [], []>} : vector<8x128xf32>, vector<128x512xf32>, vector<8x512xf32> -> vector<8x512xf32>
    %171 = arith.addf %54, %170 : vector<8x512xf32>
    %172 = vector.extract_strided_slice %171 {offsets = [0, 0], sizes = [8, 256], strides = [1, 1]} : vector<8x512xf32> to vector<8x256xf32>
    %173 = arith.negf %172 : vector<8x256xf32>
    %174 = math.exp %173 : vector<8x256xf32>
    %cst_26 = arith.constant 1.000000e+00 : f32
    %175 = vector.broadcast %cst_26 : f32 to vector<8x256xf32>
    %176 = arith.addf %175, %174 : vector<8x256xf32>
    %177 = arith.divf %175, %176 : vector<8x256xf32>
    %178 = vector.extract_strided_slice %171 {offsets = [0, 256], sizes = [8, 128], strides = [1, 1]} : vector<8x512xf32> to vector<8x128xf32>
    %179 = math.tanh %178 : vector<8x128xf32>
    %180 = vector.extract_strided_slice %171 {offsets = [0, 384], sizes = [8, 128], strides = [1, 1]} : vector<8x512xf32> to vector<8x128xf32>
    %181 = arith.negf %180 : vector<8x128xf32>
    %182 = math.exp %181 : vector<8x128xf32>
    %cst_27 = arith.constant 1.000000e+00 : f32
    %183 = vector.broadcast %cst_27 : f32 to vector<8x128xf32>
    %184 = arith.addf %183, %182 : vector<8x128xf32>
    %185 = arith.divf %183, %184 : vector<8x128xf32>
    %186 = vector.extract_strided_slice %177 {offsets = [0, 0], sizes = [8, 128], strides = [1, 1]} : vector<8x256xf32> to vector<8x128xf32>
    %187 = vector.extract_strided_slice %177 {offsets = [0, 128], sizes = [8, 128], strides = [1, 1]} : vector<8x256xf32> to vector<8x128xf32>
    %188 = arith.mulf %187, %165 : vector<8x128xf32>
    %189 = arith.mulf %186, %179 : vector<8x128xf32>
    %190 = arith.addf %188, %189 : vector<8x128xf32>
    %191 = math.tanh %190 : vector<8x128xf32>
    %192 = arith.mulf %185, %191 : vector<8x128xf32>
    %193 = arith.addf %168, %192 : vector<8x128xf32>
    %194 = arith.maximumf %169, %192 : vector<8x128xf32>
    %cst_28 = arith.constant dense<0.000000e+00> : vector<8x512xf32>
    %195 = tpu.matmul %192, %27, %cst_28 {dimension_numbers = #tpu.dot_dimension_numbers<[1], [0], [0], [1], [0, 0, 1, 1], [], []>} : vector<8x128xf32>, vector<128x512xf32>, vector<8x512xf32> -> vector<8x512xf32>
    %196 = arith.addf %59, %195 : vector<8x512xf32>
    %197 = vector.extract_strided_slice %196 {offsets = [0, 0], sizes = [8, 256], strides = [1, 1]} : vector<8x512xf32> to vector<8x256xf32>
    %198 = arith.negf %197 : vector<8x256xf32>
    %199 = math.exp %198 : vector<8x256xf32>
    %cst_29 = arith.constant 1.000000e+00 : f32
    %200 = vector.broadcast %cst_29 : f32 to vector<8x256xf32>
    %201 = arith.addf %200, %199 : vector<8x256xf32>
    %202 = arith.divf %200, %201 : vector<8x256xf32>
    %203 = vector.extract_strided_slice %196 {offsets = [0, 256], sizes = [8, 128], strides = [1, 1]} : vector<8x512xf32> to vector<8x128xf32>
    %204 = math.tanh %203 : vector<8x128xf32>
    %205 = vector.extract_strided_slice %196 {offsets = [0, 384], sizes = [8, 128], strides = [1, 1]} : vector<8x512xf32> to vector<8x128xf32>
    %206 = arith.negf %205 : vector<8x128xf32>
    %207 = math.exp %206 : vector<8x128xf32>
    %cst_30 = arith.constant 1.000000e+00 : f32
    %208 = vector.broadcast %cst_30 : f32 to vector<8x128xf32>
    %209 = arith.addf %208, %207 : vector<8x128xf32>
    %210 = arith.divf %208, %209 : vector<8x128xf32>
    %211 = vector.extract_strided_slice %202 {offsets = [0, 0], sizes = [8, 128], strides = [1, 1]} : vector<8x256xf32> to vector<8x128xf32>
    %212 = vector.extract_strided_slice %202 {offsets = [0, 128], sizes = [8, 128], strides = [1, 1]} : vector<8x256xf32> to vector<8x128xf32>
    %213 = arith.mulf %212, %190 : vector<8x128xf32>
    %214 = arith.mulf %211, %204 : vector<8x128xf32>
    %215 = arith.addf %213, %214 : vector<8x128xf32>
    %216 = math.tanh %215 : vector<8x128xf32>
    %217 = arith.mulf %210, %216 : vector<8x128xf32>
    %218 = arith.addf %193, %217 : vector<8x128xf32>
    %219 = arith.maximumf %194, %217 : vector<8x128xf32>
    %cst_31 = arith.constant dense<0.000000e+00> : vector<8x512xf32>
    %220 = tpu.matmul %217, %27, %cst_31 {dimension_numbers = #tpu.dot_dimension_numbers<[1], [0], [0], [1], [0, 0, 1, 1], [], []>} : vector<8x128xf32>, vector<128x512xf32>, vector<8x512xf32> -> vector<8x512xf32>
    %221 = arith.addf %64, %220 : vector<8x512xf32>
    %222 = vector.extract_strided_slice %221 {offsets = [0, 0], sizes = [8, 256], strides = [1, 1]} : vector<8x512xf32> to vector<8x256xf32>
    %223 = arith.negf %222 : vector<8x256xf32>
    %224 = math.exp %223 : vector<8x256xf32>
    %cst_32 = arith.constant 1.000000e+00 : f32
    %225 = vector.broadcast %cst_32 : f32 to vector<8x256xf32>
    %226 = arith.addf %225, %224 : vector<8x256xf32>
    %227 = arith.divf %225, %226 : vector<8x256xf32>
    %228 = vector.extract_strided_slice %221 {offsets = [0, 256], sizes = [8, 128], strides = [1, 1]} : vector<8x512xf32> to vector<8x128xf32>
    %229 = math.tanh %228 : vector<8x128xf32>
    %230 = vector.extract_strided_slice %221 {offsets = [0, 384], sizes = [8, 128], strides = [1, 1]} : vector<8x512xf32> to vector<8x128xf32>
    %231 = arith.negf %230 : vector<8x128xf32>
    %232 = math.exp %231 : vector<8x128xf32>
    %cst_33 = arith.constant 1.000000e+00 : f32
    %233 = vector.broadcast %cst_33 : f32 to vector<8x128xf32>
    %234 = arith.addf %233, %232 : vector<8x128xf32>
    %235 = arith.divf %233, %234 : vector<8x128xf32>
    %236 = vector.extract_strided_slice %227 {offsets = [0, 0], sizes = [8, 128], strides = [1, 1]} : vector<8x256xf32> to vector<8x128xf32>
    %237 = vector.extract_strided_slice %227 {offsets = [0, 128], sizes = [8, 128], strides = [1, 1]} : vector<8x256xf32> to vector<8x128xf32>
    %238 = arith.mulf %237, %215 : vector<8x128xf32>
    %239 = arith.mulf %236, %229 : vector<8x128xf32>
    %240 = arith.addf %238, %239 : vector<8x128xf32>
    %241 = math.tanh %240 : vector<8x128xf32>
    %242 = arith.mulf %235, %241 : vector<8x128xf32>
    %243 = arith.addf %218, %242 : vector<8x128xf32>
    %244 = arith.maximumf %219, %242 : vector<8x128xf32>
    %cst_34 = arith.constant dense<0.000000e+00> : vector<8x512xf32>
    %245 = tpu.matmul %242, %27, %cst_34 {dimension_numbers = #tpu.dot_dimension_numbers<[1], [0], [0], [1], [0, 0, 1, 1], [], []>} : vector<8x128xf32>, vector<128x512xf32>, vector<8x512xf32> -> vector<8x512xf32>
    %246 = arith.addf %69, %245 : vector<8x512xf32>
    %247 = vector.extract_strided_slice %246 {offsets = [0, 0], sizes = [8, 256], strides = [1, 1]} : vector<8x512xf32> to vector<8x256xf32>
    %248 = arith.negf %247 : vector<8x256xf32>
    %249 = math.exp %248 : vector<8x256xf32>
    %cst_35 = arith.constant 1.000000e+00 : f32
    %250 = vector.broadcast %cst_35 : f32 to vector<8x256xf32>
    %251 = arith.addf %250, %249 : vector<8x256xf32>
    %252 = arith.divf %250, %251 : vector<8x256xf32>
    %253 = vector.extract_strided_slice %246 {offsets = [0, 256], sizes = [8, 128], strides = [1, 1]} : vector<8x512xf32> to vector<8x128xf32>
    %254 = math.tanh %253 : vector<8x128xf32>
    %255 = vector.extract_strided_slice %246 {offsets = [0, 384], sizes = [8, 128], strides = [1, 1]} : vector<8x512xf32> to vector<8x128xf32>
    %256 = arith.negf %255 : vector<8x128xf32>
    %257 = math.exp %256 : vector<8x128xf32>
    %cst_36 = arith.constant 1.000000e+00 : f32
    %258 = vector.broadcast %cst_36 : f32 to vector<8x128xf32>
    %259 = arith.addf %258, %257 : vector<8x128xf32>
    %260 = arith.divf %258, %259 : vector<8x128xf32>
    %261 = vector.extract_strided_slice %252 {offsets = [0, 0], sizes = [8, 128], strides = [1, 1]} : vector<8x256xf32> to vector<8x128xf32>
    %262 = vector.extract_strided_slice %252 {offsets = [0, 128], sizes = [8, 128], strides = [1, 1]} : vector<8x256xf32> to vector<8x128xf32>
    %263 = arith.mulf %262, %240 : vector<8x128xf32>
    %264 = arith.mulf %261, %254 : vector<8x128xf32>
    %265 = arith.addf %263, %264 : vector<8x128xf32>
    %266 = math.tanh %265 : vector<8x128xf32>
    %267 = arith.mulf %260, %266 : vector<8x128xf32>
    %268 = arith.addf %243, %267 : vector<8x128xf32>
    %269 = arith.maximumf %244, %267 : vector<8x128xf32>
    %c0_37 = arith.constant 0 : index
    %c0_38 = arith.constant 0 : index
    %270 = vector.load %arg5[%c0_37, %c0_38] : memref<128x64xf32, #tpu.memory_space<vmem>>, vector<128x64xf32>
    %cst_39 = arith.constant dense<0.000000e+00> : vector<8x64xf32>
    %271 = tpu.matmul %268, %270, %cst_39 {dimension_numbers = #tpu.dot_dimension_numbers<[1], [0], [0], [1], [0, 0, 1, 1], [], []>} : vector<8x128xf32>, vector<128x64xf32>, vector<8x64xf32> -> vector<8x64xf32>
    %c0_40 = arith.constant 0 : index
    %c0_41 = arith.constant 0 : index
    %272 = vector.load %arg6[%c0_40, %c0_41] : memref<128x64xf32, #tpu.memory_space<vmem>>, vector<128x64xf32>
    %cst_42 = arith.constant dense<0.000000e+00> : vector<8x64xf32>
    %273 = tpu.matmul %269, %272, %cst_42 {dimension_numbers = #tpu.dot_dimension_numbers<[1], [0], [0], [1], [0, 0, 1, 1], [], []>} : vector<8x128xf32>, vector<128x64xf32>, vector<8x64xf32> -> vector<8x64xf32>
    %274 = arith.addf %271, %273 : vector<8x64xf32>
    %c0_43 = arith.constant 0 : index
    %c0_44 = arith.constant 0 : index
    %275 = vector.load %arg7[%c0_43, %c0_44] : memref<1x64xf32, #tpu.memory_space<vmem>>, vector<1x64xf32>
    %276 = vector.broadcast %275 : vector<1x64xf32> to vector<8x64xf32>
    %277 = arith.addf %274, %276 : vector<8x64xf32>
    %cst_45 = arith.constant 0.000000e+00 : f32
    %278 = vector.broadcast %cst_45 : f32 to vector<8x64xf32>
    %279 = arith.maximumf %277, %278 : vector<8x64xf32>
    %c0_46 = arith.constant 0 : index
    %c0_47 = arith.constant 0 : index
    %280 = vector.load %arg8[%c0_46, %c0_47] : memref<64x4xf32, #tpu.memory_space<vmem>>, vector<64x4xf32>
    %cst_48 = arith.constant dense<0.000000e+00> : vector<8x4xf32>
    %281 = tpu.matmul %279, %280, %cst_48 {dimension_numbers = #tpu.dot_dimension_numbers<[1], [0], [0], [1], [0, 0, 1, 1], [], []>} : vector<8x64xf32>, vector<64x4xf32>, vector<8x4xf32> -> vector<8x4xf32>
    %c0_49 = arith.constant 0 : index
    %c0_50 = arith.constant 0 : index
    %282 = vector.load %arg9[%c0_49, %c0_50] : memref<1x4xf32, #tpu.memory_space<vmem>>, vector<1x4xf32>
    %283 = vector.broadcast %282 : vector<1x4xf32> to vector<8x4xf32>
    %284 = arith.addf %281, %283 : vector<8x4xf32>
    %c0_51 = arith.constant 0 : index
    %c0_52 = arith.constant 0 : index
    %285 = vector.load %arg10[%c0_51, %c0_52] : memref<8x4xf32, #tpu.memory_space<vmem>>, vector<8x4xf32>
    tpu.vector_store %arg10[%c0_51, %c0_52], %284 {strides = array<i32>} : memref<8x4xf32, #tpu.memory_space<vmem>>, vector<8x4xf32>,
    return
  }
  func.func @transform_0(%arg0: i32) -> (i32, i32, i32) {
    %c0_i32 = arith.constant 0 : i32
    %c0_i32_0 = arith.constant 0 : i32
    %c0_i32_1 = arith.constant 0 : i32
    return %c0_i32, %arg0, %c0_i32_0 : i32, i32, i32
  }
  func.func @transform_1(%arg0: i32) -> (i32, i32) {
    %c0_i32 = arith.constant 0 : i32
    %c0_i32_0 = arith.constant 0 : i32
    %c0_i32_1 = arith.constant 0 : i32
    return %c0_i32, %c0_i32_0 : i32, i32
  }
  func.func @transform_2(%arg0: i32) -> (i32, i32) {
    %c0_i32 = arith.constant 0 : i32
    %c0_i32_0 = arith.constant 0 : i32
    %c0_i32_1 = arith.constant 0 : i32
    return %c0_i32, %c0_i32_0 : i32, i32
  }
  func.func @transform_3(%arg0: i32) -> (i32, i32) {
    %c0_i32 = arith.constant 0 : i32
    %c0_i32_0 = arith.constant 0 : i32
    %c0_i32_1 = arith.constant 0 : i32
    return %c0_i32, %c0_i32_0 : i32, i32
  }
  func.func @transform_4(%arg0: i32) -> (i32, i32) {
    %c0_i32 = arith.constant 0 : i32
    %c0_i32_0 = arith.constant 0 : i32
    %c0_i32_1 = arith.constant 0 : i32
    return %c0_i32, %c0_i32_0 : i32, i32
  }
  func.func @transform_5(%arg0: i32) -> (i32, i32) {
    %c0_i32 = arith.constant 0 : i32
    %c0_i32_0 = arith.constant 0 : i32
    %c0_i32_1 = arith.constant 0 : i32
    return %c0_i32, %c0_i32_0 : i32, i32
  }
  func.func @transform_6(%arg0: i32) -> (i32, i32) {
    %c0_i32 = arith.constant 0 : i32
    %c0_i32_0 = arith.constant 0 : i32
    %c0_i32_1 = arith.constant 0 : i32
    return %c0_i32, %c0_i32_0 : i32, i32
  }
  func.func @transform_7(%arg0: i32) -> (i32, i32) {
    %c0_i32 = arith.constant 0 : i32
    %c0_i32_0 = arith.constant 0 : i32
    %c0_i32_1 = arith.constant 0 : i32
    return %c0_i32, %c0_i32_0 : i32, i32
  }
  func.func @transform_8(%arg0: i32) -> (i32, i32) {
    %c0_i32 = arith.constant 0 : i32
    %c0_i32_0 = arith.constant 0 : i32
    %c0_i32_1 = arith.constant 0 : i32
    return %c0_i32, %c0_i32_0 : i32, i32
  }
  func.func @transform_9(%arg0: i32) -> (i32, i32) {
    %c0_i32 = arith.constant 0 : i32
    %c0_i32_0 = arith.constant 0 : i32
    return %arg0, %c0_i32 : i32, i32
  }
}

</mosaic_0001>

<llo_original>
// kernel: tpu_custom_call.1
$region0: #{tpu_custom_call.1}
  #allocation0 [shape = 'u32[]', space=smem, size = 0x4, offset = 0x4, fixed_abs, tag = 'smem constant byte address 0x4 - core index']
  #allocation1 [shape = 'u32[144,128]{1,0:T(1,128)}', space=vmem, size = 0x12000, scoped, tag = 'internal scratch']
  %s0 = inlined_call_operand.vmem [shape: f32[8,8,32], index: 0, kind: input, shape index: {}]
  %s1 = inlined_call_operand.vmem [shape: f32[32,512], index: 1, kind: input, shape index: {}]
  %s2 = inlined_call_operand.hbm [shape: f32[128,512], index: 2, kind: input, shape index: {}]
  %s3 = inlined_call_operand.vmem [shape: f32[1,512], index: 3, kind: input, shape index: {}]
  %s4 = inlined_call_operand.vmem [shape: f32[128,64], index: 4, kind: input, shape index: {}]
  %s5 = inlined_call_operand.vmem [shape: f32[128,64], index: 5, kind: input, shape index: {}]
  %s6 = inlined_call_operand.vmem [shape: f32[1,64], index: 6, kind: input, shape index: {}]
  %s7 = inlined_call_operand.vmem [shape: f32[64,4], index: 7, kind: input, shape index: {}]
  %s8 = inlined_call_operand.vmem [shape: f32[1,4], index: 8, kind: input, shape index: {}]
  %s9 = inlined_call_operand.vmem [shape: f32[8,4], index: 9, kind: output, shape index: {}]
  %s10 = sld [smem:[#allocation0]]
  $region50: #{tpu_custom_call.1} parent=0
    _
  %s12 = ssub.s32 1, %s10
  %s13 = scalar_select 0, %s12, %s10
  $region1: #{tpu_custom_call.1} parent=0
    #allocation2 [shape = 'u8[262144]{0}', space=vmem, size = 0x40000, scoped, tag = 'input window, operand 2, single buffered']
    #allocation3 [shape = 's32[1]{0}', space=sflag, size = 0x4, scoped, tag = 'scoped memory for tpu_custom_call.1']
    %14 = vsyncpa [#allocation3], 0
    // Predicated region
    $region2: #{tpu_custom_call.1} parent=1 // pred_check
      _
    $region3: #{tpu_custom_call.1} parent=1 // pred_check_branch
      %16 = sbr.rel (0) target = $region5
    $region4: #{tpu_custom_call.1} parent=1 // pred_region
      _
    $region5: #{tpu_custom_call.1} parent=1 // pred_fallthru
      _
    // Predicated region
    $region6: #{tpu_custom_call.1} parent=1 // pred_check
      _
    $region7: #{tpu_custom_call.1} parent=1 // pred_check_branch
      %18 = sbr.rel (0) target = $region9
    $region8: #{tpu_custom_call.1} parent=1 // pred_region
      _
    $region9: #{tpu_custom_call.1} parent=1 // pred_fallthru
      _
    // Predicated region
    $region10: #{tpu_custom_call.1} parent=1 // pred_check
      _
    $region11: #{tpu_custom_call.1} parent=1 // pred_check_branch
      %20 = sbr.rel (0) target = $region13
    $region12: #{tpu_custom_call.1} parent=1 // pred_region
      %s22 = ssub.s32 8192, 8192
      %23 = vsyncadd [#allocation3], %s22
      %s24 = sshll.u32 [#allocation2], 4
      %s25 = int_to_ptr.vmem [resolvable:$true] %s24
      %30 = dma.hbm_to_vmem [thread:$0]  %s2, 8192, %s25, [#allocation3], 512, 512, 32
    $region13: #{tpu_custom_call.1} parent=1 // pred_fallthru
      _
    // Predicated region
    $region14: #{tpu_custom_call.1} parent=1 // pred_check
      _
    $region15: #{tpu_custom_call.1} parent=1 // pred_check_branch
      %32 = sbr.rel (0) target = $region17
    $region16: #{tpu_custom_call.1} parent=1 // pred_region
      _
    $region17: #{tpu_custom_call.1} parent=1 // pred_fallthru
      _
    // Predicated region
    $region18: #{tpu_custom_call.1} parent=1 // pred_check
      _
    $region19: #{tpu_custom_call.1} parent=1 // pred_check_branch
      %34 = sbr.rel (0) target = $region21
    $region20: #{tpu_custom_call.1} parent=1 // pred_region
      _
    $region21: #{tpu_custom_call.1} parent=1 // pred_fallthru
      _
    // Predicated region
    $region22: #{tpu_custom_call.1} parent=1 // pred_check
      _
    $region23: #{tpu_custom_call.1} parent=1 // pred_check_branch
      %36 = sbr.rel (0) target = $region25
    $region24: #{tpu_custom_call.1} parent=1 // pred_region
      _
    $region25: #{tpu_custom_call.1} parent=1 // pred_fallthru
      _
    // Predicated region
    $region26: #{tpu_custom_call.1} parent=1 // pred_check
      _
    $region27: #{tpu_custom_call.1} parent=1 // pred_check_branch
      %38 = sbr.rel (0) target = $region29
    $region28: #{tpu_custom_call.1} parent=1 // pred_region
      _
    $region29: #{tpu_custom_call.1} parent=1 // pred_fallthru
      _
    // Predicated region
    $region30: #{tpu_custom_call.1} parent=1 // pred_check
      _
    $region31: #{tpu_custom_call.1} parent=1 // pred_check_branch
      %40 = sbr.rel (0) target = $region33
    $region32: #{tpu_custom_call.1} parent=1 // pred_region
      _
    $region33: #{tpu_custom_call.1} parent=1 // pred_fallthru
      _
    // Predicated region
    $region34: #{tpu_custom_call.1} parent=1 // pred_check
      _
    $region35: #{tpu_custom_call.1} parent=1 // pred_check_branch
      %42 = sbr.rel (0) target = $region37
    $region36: #{tpu_custom_call.1} parent=1 // pred_region
      _
    $region37: #{tpu_custom_call.1} parent=1 // pred_fallthru
      _
    // Predicated region
    $region38: #{tpu_custom_call.1} parent=1 // pred_check
      _
    $region39: #{tpu_custom_call.1} parent=1 // pred_check_branch
      %44 = sbr.rel (0) target = $region41
    $region40: #{tpu_custom_call.1} parent=1 // pred_region
      %45 = dma.done [#allocation3], 8192
    $region41: #{tpu_custom_call.1} parent=1 // pred_fallthru
      _
    %v46 = vld [vmem:[%s0] sm:$0xff]
    %v47 = vld [vmem:[%s0 + $0x8] sm:$0xff]
    %v48 = vld [vmem:[%s0 + $0x10] sm:$0xff]
    %v49 = vld [vmem:[%s0 + $0x18] sm:$0xff]
    %v50 = vld [vmem:[%s0 + $0x20] sm:$0xff]
    %v51 = vld [vmem:[%s0 + $0x28] sm:$0xff]
    %v52 = vld [vmem:[%s0 + $0x30] sm:$0xff]
    %v53 = vld [vmem:[%s0 + $0x38] sm:$0xff]
    %v54 = vld [vmem:[%s1] sm:$0xff]
    %v55 = vld [vmem:[%s1 + $0x8] sm:$0xff]
    %v56 = vld [vmem:[%s1 + $0x10] sm:$0xff]
    %v57 = vld [vmem:[%s1 + $0x18] sm:$0xff]
    %v58 = vld [vmem:[%s1 + $0x20] sm:$0xff]
    %v59 = vld [vmem:[%s1 + $0x28] sm:$0xff]
    %v60 = vld [vmem:[%s1 + $0x30] sm:$0xff]
    %v61 = vld [vmem:[%s1 + $0x38] sm:$0xff]
    %v62 = vld [vmem:[%s1 + $0x40] sm:$0xff]
    %v63 = vld [vmem:[%s1 + $0x48] sm:$0xff]
    %v64 = vld [vmem:[%s1 + $0x50] sm:$0xff]
    %v65 = vld [vmem:[%s1 + $0x58] sm:$0xff]
    %v66 = vld [vmem:[%s1 + $0x60] sm:$0xff]
    %v67 = vld [vmem:[%s1 + $0x68] sm:$0xff]
    %v68 = vld [vmem:[%s1 + $0x70] sm:$0xff]
    %v69 = vld [vmem:[%s1 + $0x78] sm:$0xff]
    %v70 = vld [vmem:[%s3] sm:$0xf]
    %v72 = vlaneseq
    %v73 = vshrl.u32 %v72, 7
    %v74 = vsub.s32 0, %v73
    %v75 = vrot.slane %v70, %v74
    %v76 = vlaneseq
    %v77 = vshrl.u32 %v76, 7
    %v78 = vsub.s32 1, %v77
    %v79 = vrot.slane %v70, %v78
    %v80 = vlaneseq
    %v81 = vshrl.u32 %v80, 7
    %v82 = vsub.s32 2, %v81
    %v83 = vrot.slane %v70, %v82
    %v84 = vlaneseq
    %v85 = vshrl.u32 %v84, 7
    %v86 = vsub.s32 3, %v85
    %v87 = vrot.slane %v70, %v86
    %vm92 = vcmask 261120
    %v94 = vsel %vm92, %v46, 0
    %v97 = vsel %vm92, %v47, 0
    %v100 = vsel %vm92, %v48, 0
    %v103 = vsel %vm92, %v49, 0
    %v106 = vsel %vm92, %v50, 0
    %v109 = vsel %vm92, %v51, 0
    %v112 = vsel %vm92, %v52, 0
    %v115 = vsel %vm92, %v53, 0
    %117 = vmatprep.subr.mxu0 0.0
    %118 = vmatpush1.msra.mxu0 0.0
    %119 = vmatprep.subr.mxu0 0.0
    %120 = vmatpush1.msra.mxu0 0.0
    %121 = vmatprep.subr.mxu0 0.0
    %122 = vmatpush1.msra.mxu0 0.0
    %123 = vmatprep.subr.mxu0 0.0
    %124 = vmatpush1.msra.mxu0 0.0
    %125 = vmatprep.subr.mxu0 0.0
    %126 = vmatpush1.msra.mxu0 0.0
    %127 = vmatprep.subr.mxu0 0.0
    %128 = vmatpush1.msra.mxu0 0.0
    %129 = vmatprep.subr.mxu0 0.0
    %130 = vmatpush1.msra.mxu0 0.0
    %131 = vmatprep.subr.mxu0 0.0
    %132 = vmatpush1.msra.mxu0 0.0
    %133 = vmatprep.subr.mxu0 0.0
    %134 = vmatpush1.msra.mxu0 0.0
    %135 = vmatprep.subr.mxu0 0.0
    %136 = vmatpush1.msra.mxu0 0.0
    %137 = vmatprep.subr.mxu0 0.0
    %138 = vmatpush1.msra.mxu0 0.0
    %139 = vmatprep.subr.mxu0 0.0
    %140 = vmatpush1.msra.mxu0 0.0
    %141 = vmatprep.subr.mxu0 %v67
    %142 = vmatpush1.msra.mxu0 %v66
    %143 = vmatprep.subr.mxu0 %v63
    %144 = vmatpush1.msra.mxu0 %v62
    %145 = vmatprep.subr.mxu0 %v59
    %146 = vmatpush1.msra.mxu0 %v58
    %147 = vmatprep.subr.mxu0 %v55
    %148 = vmatpush1.msra.mxu0 %v54
    %149 = vmatprep.subr.mxu0 0.0
    %150 = vmatpush2.msra.mxu0 0.0
    %151 = vmatprep.subr.mxu0 0.0
    %152 = vmatpush2.msra.mxu0 0.0
    %153 = vmatprep.subr.mxu0 0.0
    %154 = vmatpush2.msra.mxu0 0.0
    %155 = vmatprep.subr.mxu0 0.0
    %156 = vmatpush2.msra.mxu0 0.0
    %157 = vmatprep.subr.mxu0 0.0
    %158 = vmatpush2.msra.mxu0 0.0
    %159 = vmatprep.subr.mxu0 0.0
    %160 = vmatpush2.msra.mxu0 0.0
    %161 = vmatprep.subr.mxu0 0.0
    %162 = vmatpush2.msra.mxu0 0.0
    %163 = vmatprep.subr.mxu0 0.0
    %164 = vmatpush2.msra.mxu0 0.0
    %165 = vmatprep.subr.mxu0 0.0
    %166 = vmatpush2.msra.mxu0 0.0
    %167 = vmatprep.subr.mxu0 0.0
    %168 = vmatpush2.msra.mxu0 0.0
    %169 = vmatprep.subr.mxu0 0.0
    %170 = vmatpush2.msra.mxu0 0.0
    %171 = vmatprep.subr.mxu0 0.0
    %172 = vmatpush2.msra.mxu0 0.0
    %173 = vmatprep.subr.mxu0 0.0
    %174 = vmatpush2.msra.mxu0 0.0
    %175 = vmatprep.subr.mxu0 0.0
    %176 = vmatpush2.msra.mxu0 0.0
    %177 = vmatprep.subr.mxu0 0.0
    %178 = vmatpush2.msra.mxu0 0.0
    %179 = vmatprep.subr.mxu0 0.0
    %180 = vmatpush2.msra.mxu0 0.0
    %181 = vmatprep.mubr.f32.mxu0 0.0
    %182 = vmatmul.mubr.f32.gmra.mxu0 %v94
    %v183 = vpop.f32.mrf.mxu0
    %v184 = vadd.f32 %v75, %v183
    %v185 = vpop.f32.mrf.mxu0
    %v186 = vadd.f32 %v79, %v185
    %187 = vmatprep.mubr.f32.mxu0 0.0
    %188 = vmatmul.mubr.f32.gmra.mxu0 %v97
    %v189 = vpop.f32.mrf.mxu0
    %v190 = vadd.f32 %v75, %v189
    %v191 = vpop.f32.mrf.mxu0
    %v192 = vadd.f32 %v79, %v191
    %193 = vmatprep.mubr.f32.mxu0 0.0
    %194 = vmatmul.mubr.f32.gmra.mxu0 %v100
    %v195 = vpop.f32.mrf.mxu0
    %v196 = vadd.f32 %v75, %v195
    %v197 = vpop.f32.mrf.mxu0
    %v198 = vadd.f32 %v79, %v197
    %199 = vmatprep.mubr.f32.mxu0 0.0
    %200 = vmatmul.mubr.f32.gmra.mxu0 %v103
    %v201 = vpop.f32.mrf.mxu0
    %v202 = vadd.f32 %v75, %v201
    %v203 = vpop.f32.mrf.mxu0
    %v204 = vadd.f32 %v79, %v203
    %205 = vmatprep.mubr.f32.mxu0 0.0
    %206 = vmatmul.mubr.f32.gmra.mxu0 %v106
    %v207 = vpop.f32.mrf.mxu0
    %v208 = vadd.f32 %v75, %v207
    %v209 = vpop.f32.mrf.mxu0
    %v210 = vadd.f32 %v79, %v209
    %211 = vmatprep.mubr.f32.mxu0 0.0
    %212 = vmatmul.mubr.f32.gmra.mxu0 %v109
    %v213 = vpop.f32.mrf.mxu0
    %v214 = vadd.f32 %v75, %v213
    %v215 = vpop.f32.mrf.mxu0
    %v216 = vadd.f32 %v79, %v215
    %217 = vmatprep.mubr.f32.mxu0 0.0
    %218 = vmatmul.mubr.f32.gmra.mxu0 %v112
    %v219 = vpop.f32.mrf.mxu0
    %v220 = vadd.f32 %v75, %v219
    %v221 = vpop.f32.mrf.mxu0
    %v222 = vadd.f32 %v79, %v221
    %223 = vmatprep.mubr.f32.mxu0 0.0
    %224 = vmatmul.mubr.f32.gmra.mxu0 %v115
    %v225 = vpop.f32.mrf.mxu0
    %v226 = vadd.f32 %v75, %v225
    %v227 = vpop.f32.mrf.mxu0
    %v228 = vadd.f32 %v79, %v227
    %229 = vdwg.mxu0
    %230 = vmatprep.subr.mxu0 0.0
    %231 = vmatpush1.msra.mxu0 0.0
    %232 = vmatprep.subr.mxu0 0.0
    %233 = vmatpush1.msra.mxu0 0.0
    %234 = vmatprep.subr.mxu0 0.0
    %235 = vmatpush1.msra.mxu0 0.0
    %236 = vmatprep.subr.mxu0 0.0
    %237 = vmatpush1.msra.mxu0 0.0
    %238 = vmatprep.subr.mxu0 0.0
    %239 = vmatpush1.msra.mxu0 0.0
    %240 = vmatprep.subr.mxu0 0.0
    %241 = vmatpush1.msra.mxu0 0.0
    %242 = vmatprep.subr.mxu0 0.0
    %243 = vmatpush1.msra.mxu0 0.0
    %244 = vmatprep.subr.mxu0 0.0
    %245 = vmatpush1.msra.mxu0 0.0
    %246 = vmatprep.subr.mxu0 0.0
    %247 = vmatpush1.msra.mxu0 0.0
    %248 = vmatprep.subr.mxu0 0.0
    %249 = vmatpush1.msra.mxu0 0.0
    %250 = vmatprep.subr.mxu0 0.0
    %251 = vmatpush1.msra.mxu0 0.0
    %252 = vmatprep.subr.mxu0 0.0
    %253 = vmatpush1.msra.mxu0 0.0
    %254 = vmatprep.subr.mxu0 %v69
    %255 = vmatpush1.msra.mxu0 %v68
    %256 = vmatprep.subr.mxu0 %v65
    %257 = vmatpush1.msra.mxu0 %v64
    %258 = vmatprep.subr.mxu0 %v61
    %259 = vmatpush1.msra.mxu0 %v60
    %260 = vmatprep.subr.mxu0 %v57
    %261 = vmatpush1.msra.mxu0 %v56
    %262 = vmatprep.subr.mxu0 0.0
    %263 = vmatpush2.msra.mxu0 0.0
    %264 = vmatprep.subr.mxu0 0.0
    %265 = vmatpush2.msra.mxu0 0.0
    %266 = vmatprep.subr.mxu0 0.0
    %267 = vmatpush2.msra.mxu0 0.0
    %268 = vmatprep.subr.mxu0 0.0
    %269 = vmatpush2.msra.mxu0 0.0
    %270 = vmatprep.subr.mxu0 0.0
    %271 = vmatpush2.msra.mxu0 0.0
    %272 = vmatprep.subr.mxu0 0.0
    %273 = vmatpush2.msra.mxu0 0.0
    %274 = vmatprep.subr.mxu0 0.0
    %275 = vmatpush2.msra.mxu0 0.0
    %276 = vmatprep.subr.mxu0 0.0
    %277 = vmatpush2.msra.mxu0 0.0
    %278 = vmatprep.subr.mxu0 0.0
    %279 = vmatpush2.msra.mxu0 0.0
    %280 = vmatprep.subr.mxu0 0.0
    %281 = vmatpush2.msra.mxu0 0.0
    %282 = vmatprep.subr.mxu0 0.0
    %283 = vmatpush2.msra.mxu0 0.0
    %284 = vmatprep.subr.mxu0 0.0
    %285 = vmatpush2.msra.mxu0 0.0
    %286 = vmatprep.subr.mxu0 0.0
    %287 = vmatpush2.msra.mxu0 0.0
    %288 = vmatprep.subr.mxu0 0.0
    %289 = vmatpush2.msra.mxu0 0.0
    %290 = vmatprep.subr.mxu0 0.0
    %291 = vmatpush2.msra.mxu0 0.0
    %292 = vmatprep.subr.mxu0 0.0
    %293 = vmatpush2.msra.mxu0 0.0
    %294 = vmatprep.mubr.f32.mxu0 0.0
    %295 = vmatmul.mubr.f32.gmra.mxu0 %v94
    %v296 = vpop.f32.mrf.mxu0
    %v297 = vadd.f32 %v83, %v296
    %v298 = vpop.f32.mrf.mxu0
    %v299 = vadd.f32 %v87, %v298
    %300 = vmatprep.mubr.f32.mxu0 0.0
    %301 = vmatmul.mubr.f32.gmra.mxu0 %v97
    %v302 = vpop.f32.mrf.mxu0
    %v303 = vadd.f32 %v83, %v302
    %v304 = vpop.f32.mrf.mxu0
    %v305 = vadd.f32 %v87, %v304
    %306 = vmatprep.mubr.f32.mxu0 0.0
    %307 = vmatmul.mubr.f32.gmra.mxu0 %v100
    %v308 = vpop.f32.mrf.mxu0
    %v309 = vadd.f32 %v83, %v308
    %v310 = vpop.f32.mrf.mxu0
    %v311 = vadd.f32 %v87, %v310
    %312 = vmatprep.mubr.f32.mxu0 0.0
    %313 = vmatmul.mubr.f32.gmra.mxu0 %v103
    %v314 = vpop.f32.mrf.mxu0
    %v315 = vadd.f32 %v83, %v314
    %v316 = vpop.f32.mrf.mxu0
    %v317 = vadd.f32 %v87, %v316
    %318 = vmatprep.mubr.f32.mxu0 0.0
    %319 = vmatmul.mubr.f32.gmra.mxu0 %v106
    %v320 = vpop.f32.mrf.mxu0
    %v321 = vadd.f32 %v83, %v320
    %v322 = vpop.f32.mrf.mxu0
    %v323 = vadd.f32 %v87, %v322
    %324 = vmatprep.mubr.f32.mxu0 0.0
    %325 = vmatmul.mubr.f32.gmra.mxu0 %v109
    %v326 = vpop.f32.mrf.mxu0
    %v327 = vadd.f32 %v83, %v326
    %v328 = vpop.f32.mrf.mxu0
    %v329 = vadd.f32 %v87, %v328
    %330 = vmatprep.mubr.f32.mxu0 0.0
    %331 = vmatmul.mubr.f32.gmra.mxu0 %v112
    %v332 = vpop.f32.mrf.mxu0
    %v333 = vadd.f32 %v83, %v332
    %v334 = vpop.f32.mrf.mxu0
    %v335 = vadd.f32 %v87, %v334
    %336 = vmatprep.mubr.f32.mxu0 0.0
    %337 = vmatmul.mubr.f32.gmra.mxu0 %v115
    %v338 = vpop.f32.mrf.mxu0
    %v339 = vadd.f32 %v83, %v338
    %v340 = vpop.f32.mrf.mxu0
    %v341 = vadd.f32 %v87, %v340
    %342 = vdwg.mxu0
    %v343 = vlaneseq
    %v344 = vand.u32 %v343, 127
    %v345 = vadd.s32 %v344, 128
    %v346 = vadd.s32 %v344, 256
    %v347 = vadd.s32 %v344, 384
    %vm348 = vcmp.lt.s32.totalorder %v344, 0
    %v349 = vsub.s32 0, %v344
    %v350 = vsel %vm348, %v349, %v344
    %v351 = vshrl.u32 %v350, 7
    %v352 = vand.u32 %v350, 127
    %v353 = vsub.s32 0, %v352
    %v354 = vsel %vm348, %v353, %v352
    %vm355 = vcmp.lt.s32.totalorder %v345, 0
    %v356 = vsub.s32 0, %v345
    %v357 = vsel %vm355, %v356, %v345
    %v358 = vshrl.u32 %v357, 7
    %v359 = vand.u32 %v357, 127
    %v360 = vsub.s32 0, %v359
    %v361 = vsel %vm355, %v360, %v359
    %vm362 = vcmp.lt.s32.totalorder %v346, 0
    %v363 = vsub.s32 0, %v346
    %v364 = vsel %vm362, %v363, %v346
    %v365 = vshrl.u32 %v364, 7
    %v366 = vand.u32 %v364, 127
    %v367 = vsub.s32 0, %v366
    %v368 = vsel %vm362, %v367, %v366
    %vm369 = vcmp.lt.s32.totalorder %v347, 0
    %v370 = vsub.s32 0, %v347
    %v371 = vsel %vm369, %v370, %v347
    %v372 = vshrl.u32 %v371, 7
    %v373 = vand.u32 %v371, 127
    %v374 = vsub.s32 0, %v373
    %v375 = vsel %vm369, %v374, %v373
    %vm376 = vcmp.ne.s32.totalorder %v354, 0
    %vm377 = vcmp.ne.s32.totalorder %v361, 0
    %vm378 = vcmp.ne.s32.totalorder %v368, 0
    %vm379 = vcmp.ne.s32.totalorder %v375, 0
    %vm380 = vcmp.lt.s32.totalorder %v354, 0
    %vm381 = vcmp.lt.s32.totalorder %v361, 0
    %vm382 = vcmp.lt.s32.totalorder %v368, 0
    %vm383 = vcmp.lt.s32.totalorder %v375, 0
    %vm384 = vmand %vm380, %vm376
    %vm385 = vmand %vm381, %vm377
    %vm386 = vmand %vm382, %vm378
    %vm387 = vmand %vm383, %vm379
    %v388 = vadd.s32 %v354, 128
    %v389 = vadd.s32 %v361, 128
    %v390 = vadd.s32 %v368, 128
    %v391 = vadd.s32 %v375, 128
    %v392 = vsel %vm384, %v388, %v354
    %v393 = vsel %vm385, %v389, %v361
    %v394 = vsel %vm386, %v390, %v368
    %v395 = vsel %vm387, %v391, %v375
    %vm396 = vcmp.lt.s32.totalorder %v392, 64
    %vm397 = vcmp.lt.s32.totalorder %v393, 64
    %vm398 = vcmp.lt.s32.totalorder %v394, 64
    %vm399 = vcmp.lt.s32.totalorder %v395, 64
    %v400 = vld [vmem:[#allocation2] sm:$0xff]
    %v401 = vld [vmem:[#allocation2 + $0x8] sm:$0xff]
    %v402 = vld [vmem:[#allocation2 + $0x10] sm:$0xff]
    %v403 = vld [vmem:[#allocation2 + $0x18] sm:$0xff]
    %v404 = vld [vmem:[#allocation2 + $0x20] sm:$0xff]
    %v405 = vld [vmem:[#allocation2 + $0x28] sm:$0xff]
    %v406 = vld [vmem:[#allocation2 + $0x30] sm:$0xff]
    %v407 = vld [vmem:[#allocation2 + $0x38] sm:$0xff]
    %v408 = vld [vmem:[#allocation2 + $0x40] sm:$0xff]
    %v409 = vld [vmem:[#allocation2 + $0x48] sm:$0xff]
    %v410 = vld [vmem:[#allocation2 + $0x50] sm:$0xff]
    %v411 = vld [vmem:[#allocation2 + $0x58] sm:$0xff]
    %v412 = vld [vmem:[#allocation2 + $0x60] sm:$0xff]
    %v413 = vld [vmem:[#allocation2 + $0x68] sm:$0xff]
    %v414 = vld [vmem:[#allocation2 + $0x70] sm:$0xff]
    %v415 = vld [vmem:[#allocation2 + $0x78] sm:$0xff]
    %v416 = vld [vmem:[#allocation2 + $0x80] sm:$0xff]
    %v417 = vld [vmem:[#allocation2 + $0x88] sm:$0xff]
    %v418 = vld [vmem:[#allocation2 + $0x90] sm:$0xff]
    %v419 = vld [vmem:[#allocation2 + $0x98] sm:$0xff]
    %v420 = vld [vmem:[#allocation2 + $0xa0] sm:$0xff]
    %v421 = vld [vmem:[#allocation2 + $0xa8] sm:$0xff]
    %v422 = vld [vmem:[#allocation2 + $0xb0] sm:$0xff]
    %v423 = vld [vmem:[#allocation2 + $0xb8] sm:$0xff]
    %v424 = vld [vmem:[#allocation2 + $0xc0] sm:$0xff]
    %v425 = vld [vmem:[#allocation2 + $0xc8] sm:$0xff]
    %v426 = vld [vmem:[#allocation2 + $0xd0] sm:$0xff]
    %v427 = vld [vmem:[#allocation2 + $0xd8] sm:$0xff]
    %v428 = vld [vmem:[#allocation2 + $0xe0] sm:$0xff]
    %v429 = vld [vmem:[#allocation2 + $0xe8] sm:$0xff]
    %v430 = vld [vmem:[#allocation2 + $0xf0] sm:$0xff]
    %v431 = vld [vmem:[#allocation2 + $0xf8] sm:$0xff]
    %v432 = vld [vmem:[#allocation2 + $0x100] sm:$0xff]
    %v433 = vld [vmem:[#allocation2 + $0x108] sm:$0xff]
    %v434 = vld [vmem:[#allocation2 + $0x110] sm:$0xff]
    %v435 = vld [vmem:[#allocation2 + $0x118] sm:$0xff]
    %v436 = vld [vmem:[#allocation2 + $0x120] sm:$0xff]
    %v437 = vld [vmem:[#allocation2 + $0x128] sm:$0xff]
    %v438 = vld [vmem:[#allocation2 + $0x130] sm:$0xff]
    %v439 = vld [vmem:[#allocation2 + $0x138] sm:$0xff]
    %v440 = vld [vmem:[#allocation2 + $0x140] sm:$0xff]
    %v441 = vld [vmem:[#allocation2 + $0x148] sm:$0xff]
    %v442 = vld [vmem:[#allocation2 + $0x150] sm:$0xff]
    %v443 = vld [vmem:[#allocation2 + $0x158] sm:$0xff]
    %v444 = vld [vmem:[#allocation2 + $0x160] sm:$0xff]
    %v445 = vld [vmem:[#allocation2 + $0x168] sm:$0xff]
    %v446 = vld [vmem:[#allocation2 + $0x170] sm:$0xff]
    %v447 = vld [vmem:[#allocation2 + $0x178] sm:$0xff]
    %v448 = vld [vmem:[#allocation2 + $0x180] sm:$0xff]
    %v449 = vld [vmem:[#allocation2 + $0x188] sm:$0xff]
    %v450 = vld [vmem:[#allocation2 + $0x190] sm:$0xff]
    %v451 = vld [vmem:[#allocation2 + $0x198] sm:$0xff]
    %v452 = vld [vmem:[#allocation2 + $0x1a0] sm:$0xff]
    %v453 = vld [vmem:[#allocation2 + $0x1a8] sm:$0xff]
    %v454 = vld [vmem:[#allocation2 + $0x1b0] sm:$0xff]
    %v455 = vld [vmem:[#allocation2 + $0x1b8] sm:$0xff]
    %v456 = vld [vmem:[#allocation2 + $0x1c0] sm:$0xff]
    %v457 = vld [vmem:[#allocation2 + $0x1c8] sm:$0xff]
    %v458 = vld [vmem:[#allocation2 + $0x1d0] sm:$0xff]
    %v459 = vld [vmem:[#allocation2 + $0x1d8] sm:$0xff]
    %v460 = vld [vmem:[#allocation2 + $0x1e0] sm:$0xff]
    %v461 = vld [vmem:[#allocation2 + $0x1e8] sm:$0xff]
    %v462 = vld [vmem:[#allocation2 + $0x1f0] sm:$0xff]
    %v463 = vld [vmem:[#allocation2 + $0x1f8] sm:$0xff]
    %v464 = vsel %vm396, %v184, %v226
    %v465 = vsel %vm397, %v186, %v228
    %v466 = vsel %vm398, %v297, %v339
    %v467 = vsel %vm399, %v299, %v341
    %v468 = vsel %vm396, %v190, %v220
    %v469 = vsel %vm397, %v192, %v222
    %v470 = vsel %vm398, %v303, %v333
    %v471 = vsel %vm399, %v305, %v335
    %v472 = vsel %vm396, %v196, %v214
    %v473 = vsel %vm397, %v198, %v216
    %v474 = vsel %vm398, %v309, %v327
    %v475 = vsel %vm399, %v311, %v329
    %v476 = vsel %vm396, %v202, %v208
    %v477 = vsel %vm397, %v204, %v210
    %v478 = vsel %vm398, %v315, %v321
    %v479 = vsel %vm399, %v317, %v323
    %v480 = vsel %vm396, %v208, %v202
    %v481 = vsel %vm397, %v210, %v204
    %v482 = vsel %vm398, %v321, %v315
    %v483 = vsel %vm399, %v323, %v317
    %v484 = vsel %vm396, %v214, %v196
    %v485 = vsel %vm397, %v216, %v198
    %v486 = vsel %vm398, %v327, %v309
    %v487 = vsel %vm399, %v329, %v311
    %v488 = vsel %vm396, %v220, %v190
    %v489 = vsel %vm397, %v222, %v192
    %v490 = vsel %vm398, %v333, %v303
    %v491 = vsel %vm399, %v335, %v305
    %v492 = vsel %vm396, %v226, %v184
    %v493 = vsel %vm397, %v228, %v186
    %v494 = vsel %vm398, %v339, %v297
    %v495 = vsel %vm399, %v341, %v299
    %496 = vmatprep.subr.mxu0 %v461
    %497 = vmatpush1.msra.mxu0 %v460
    %498 = vmatprep.subr.mxu0 %v457
    %499 = vmatpush1.msra.mxu0 %v456
    %500 = vmatprep.subr.mxu0 %v453
    %501 = vmatpush1.msra.mxu0 %v452
    %502 = vmatprep.subr.mxu0 %v449
    %503 = vmatpush1.msra.mxu0 %v448
    %504 = vmatprep.subr.mxu0 %v445
    %505 = vmatpush1.msra.mxu0 %v444
    %506 = vmatprep.subr.mxu0 %v441
    %507 = vmatpush1.msra.mxu0 %v440
    %508 = vmatprep.subr.mxu0 %v437
    %509 = vmatpush1.msra.mxu0 %v436
    %510 = vmatprep.subr.mxu0 %v433
    %511 = vmatpush1.msra.mxu0 %v432
    %512 = vmatprep.subr.mxu0 %v429
    %513 = vmatpush1.msra.mxu0 %v428
    %514 = vmatprep.subr.mxu0 %v425
    %515 = vmatpush1.msra.mxu0 %v424
    %516 = vmatprep.subr.mxu0 %v421
    %517 = vmatpush1.msra.mxu0 %v420
    %518 = vmatprep.subr.mxu0 %v417
    %519 = vmatpush1.msra.mxu0 %v416
    %520 = vmatprep.subr.mxu0 %v413
    %521 = vmatpush1.msra.mxu0 %v412
    %522 = vmatprep.subr.mxu0 %v409
    %523 = vmatpush1.msra.mxu0 %v408
    %524 = vmatprep.subr.mxu0 %v405
    %525 = vmatpush1.msra.mxu0 %v404
    %526 = vmatprep.subr.mxu0 %v401
    %527 = vmatpush1.msra.mxu0 %v400
    %528 = vmatprep.subr.mxu0 0.0
    %529 = vmatpush2.msra.mxu0 0.0
    %530 = vmatprep.subr.mxu0 0.0
    %531 = vmatpush2.msra.mxu0 0.0
    %532 = vmatprep.subr.mxu0 0.0
    %533 = vmatpush2.msra.mxu0 0.0
    %534 = vmatprep.subr.mxu0 0.0
    %535 = vmatpush2.msra.mxu0 0.0
    %536 = vmatprep.subr.mxu0 0.0
    %537 = vmatpush2.msra.mxu0 0.0
    %538 = vmatprep.subr.mxu0 0.0
    %539 = vmatpush2.msra.mxu0 0.0
    %540 = vmatprep.subr.mxu0 0.0
    %541 = vmatpush2.msra.mxu0 0.0
    %542 = vmatprep.subr.mxu0 0.0
    %543 = vmatpush2.msra.mxu0 0.0
    %544 = vmatprep.subr.mxu0 0.0
    %545 = vmatpush2.msra.mxu0 0.0
    %546 = vmatprep.subr.mxu0 0.0
    %547 = vmatpush2.msra.mxu0 0.0
    %548 = vmatprep.subr.mxu0 0.0
    %549 = vmatpush2.msra.mxu0 0.0
    %550 = vmatprep.subr.mxu0 0.0
    %551 = vmatpush2.msra.mxu0 0.0
    %552 = vmatprep.subr.mxu0 0.0
    %553 = vmatpush2.msra.mxu0 0.0
    %554 = vmatprep.subr.mxu0 0.0
    %555 = vmatpush2.msra.mxu0 0.0
    %556 = vmatprep.subr.mxu0 0.0
    %557 = vmatpush2.msra.mxu0 0.0
    %558 = vmatprep.subr.mxu0 0.0
    %559 = vmatpush2.msra.mxu0 0.0
    %560 = vmatprep.mubr.f32.mxu0 0.0
    %561 = vmatmul.mubr.f32.gmra.mxu0 0.0
    %v562 = vpop.f32.mrf.mxu0
    %v563 = vadd.f32 0.0, %v562
    %v564 = vpop.f32.mrf.mxu0
    %v565 = vadd.f32 0.0, %v564
    %566 = vdwg.mxu0
    %567 = vmatprep.subr.mxu0 %v463
    %568 = vmatpush1.msra.mxu0 %v462
    %569 = vmatprep.subr.mxu0 %v459
    %570 = vmatpush1.msra.mxu0 %v458
    %571 = vmatprep.subr.mxu0 %v455
    %572 = vmatpush1.msra.mxu0 %v454
    %573 = vmatprep.subr.mxu0 %v451
    %574 = vmatpush1.msra.mxu0 %v450
    %575 = vmatprep.subr.mxu0 %v447
    %576 = vmatpush1.msra.mxu0 %v446
    %577 = vmatprep.subr.mxu0 %v443
    %578 = vmatpush1.msra.mxu0 %v442
    %579 = vmatprep.subr.mxu0 %v439
    %580 = vmatpush1.msra.mxu0 %v438
    %581 = vmatprep.subr.mxu0 %v435
    %582 = vmatpush1.msra.mxu0 %v434
    %583 = vmatprep.subr.mxu0 %v431
    %584 = vmatpush1.msra.mxu0 %v430
    %585 = vmatprep.subr.mxu0 %v427
    %586 = vmatpush1.msra.mxu0 %v426
    %587 = vmatprep.subr.mxu0 %v423
    %588 = vmatpush1.msra.mxu0 %v422
    %589 = vmatprep.subr.mxu0 %v419
    %590 = vmatpush1.msra.mxu0 %v418
    %591 = vmatprep.subr.mxu0 %v415
    %592 = vmatpush1.msra.mxu0 %v414
    %593 = vmatprep.subr.mxu0 %v411
    %594 = vmatpush1.msra.mxu0 %v410
    %595 = vmatprep.subr.mxu0 %v407
    %596 = vmatpush1.msra.mxu0 %v406
    %597 = vmatprep.subr.mxu0 %v403
    %598 = vmatpush1.msra.mxu0 %v402
    %599 = vmatprep.subr.mxu0 0.0
    %600 = vmatpush2.msra.mxu0 0.0
    %601 = vmatprep.subr.mxu0 0.0
    %602 = vmatpush2.msra.mxu0 0.0
    %603 = vmatprep.subr.mxu0 0.0
    %604 = vmatpush2.msra.mxu0 0.0
    %605 = vmatprep.subr.mxu0 0.0
    %606 = vmatpush2.msra.mxu0 0.0
    %607 = vmatprep.subr.mxu0 0.0
    %608 = vmatpush2.msra.mxu0 0.0
    %609 = vmatprep.subr.mxu0 0.0
    %610 = vmatpush2.msra.mxu0 0.0
    %611 = vmatprep.subr.mxu0 0.0
    %612 = vmatpush2.msra.mxu0 0.0
    %613 = vmatprep.subr.mxu0 0.0
    %614 = vmatpush2.msra.mxu0 0.0
    %615 = vmatprep.subr.mxu0 0.0
    %616 = vmatpush2.msra.mxu0 0.0
    %617 = vmatprep.subr.mxu0 0.0
    %618 = vmatpush2.msra.mxu0 0.0
    %619 = vmatprep.subr.mxu0 0.0
    %620 = vmatpush2.msra.mxu0 0.0
    %621 = vmatprep.subr.mxu0 0.0
    %622 = vmatpush2.msra.mxu0 0.0
    %623 = vmatprep.subr.mxu0 0.0
    %624 = vmatpush2.msra.mxu0 0.0
    %625 = vmatprep.subr.mxu0 0.0
    %626 = vmatpush2.msra.mxu0 0.0
    %627 = vmatprep.subr.mxu0 0.0
    %628 = vmatpush2.msra.mxu0 0.0
    %629 = vmatprep.subr.mxu0 0.0
    %630 = vmatpush2.msra.mxu0 0.0
    %631 = vmatprep.mubr.f32.mxu0 0.0
    %632 = vmatmul.mubr.f32.gmra.mxu0 0.0
    %v633 = vpop.f32.mrf.mxu0
    %v634 = vadd.f32 0.0, %v633
    %v635 = vpop.f32.mrf.mxu0
    %v636 = vadd.f32 0.0, %v635
    %637 = vdwg.mxu0
    %v638 = vadd.f32 %v464, %v563
    %v639 = vadd.f32 %v465, %v565
    %v640 = vadd.f32 %v466, %v634
    %v641 = vadd.f32 %v467, %v636
    %v642 = vxor.u32 %v638, 2147483648
    %v643 = vxor.u32 %v639, 2147483648
    %v644 = vmul.f32 %v642, 1.442695
    %v645 = vpow.pop %v644
    %v646 = vmul.f32 %v643, 1.442695
    %v647 = vpow.pop %v646
    %v648 = vadd.f32 %v645, 1.0
    %v649 = vadd.f32 %v647, 1.0
    %v650 = vrcp.pop %v648
    %v651 = vmul.f32 1.0, %v650
    %v652 = vrcp.pop %v649
    %v653 = vmul.f32 1.0, %v652
    %v654 = vtanh.pop %v640
    %v655 = vxor.u32 %v641, 2147483648
    %v656 = vmul.f32 %v655, 1.442695
    %v657 = vpow.pop %v656
    %v658 = vadd.f32 %v657, 1.0
    %v659 = vrcp.pop %v658
    %v660 = vmul.f32 1.0, %v659
    %v661 = vmul.f32 %v653, 0.0
    %v662 = vmul.f32 %v651, %v654
    %v663 = vadd.f32 %v661, %v662
    %v664 = vtanh.pop %v663
    %v665 = vmul.f32 %v660, %v664
    %v666 = vadd.f32 %v665, 0.0
    %667 = vmatprep.subr.mxu0 %v461
    %668 = vmatpush1.msra.mxu0 %v460
    %669 = vmatprep.subr.mxu0 %v457
    %670 = vmatpush1.msra.mxu0 %v456
    %671 = vmatprep.subr.mxu0 %v453
    %672 = vmatpush1.msra.mxu0 %v452
    %673 = vmatprep.subr.mxu0 %v449
    %674 = vmatpush1.msra.mxu0 %v448
    %675 = vmatprep.subr.mxu0 %v445
    %676 = vmatpush1.msra.mxu0 %v444
    %677 = vmatprep.subr.mxu0 %v441
    %678 = vmatpush1.msra.mxu0 %v440
    %679 = vmatprep.subr.mxu0 %v437
    %680 = vmatpush1.msra.mxu0 %v436
    %681 = vmatprep.subr.mxu0 %v433
    %682 = vmatpush1.msra.mxu0 %v432
    %683 = vmatprep.subr.mxu0 %v429
    %684 = vmatpush1.msra.mxu0 %v428
    %685 = vmatprep.subr.mxu0 %v425
    %686 = vmatpush1.msra.mxu0 %v424
    %687 = vmatprep.subr.mxu0 %v421
    %688 = vmatpush1.msra.mxu0 %v420
    %689 = vmatprep.subr.mxu0 %v417
    %690 = vmatpush1.msra.mxu0 %v416
    %691 = vmatprep.subr.mxu0 %v413
    %692 = vmatpush1.msra.mxu0 %v412
    %693 = vmatprep.subr.mxu0 %v409
    %694 = vmatpush1.msra.mxu0 %v408
    %695 = vmatprep.subr.mxu0 %v405
    %696 = vmatpush1.msra.mxu0 %v404
    %697 = vmatprep.subr.mxu0 %v401
    %698 = vmatpush1.msra.mxu0 %v400
    %699 = vmatprep.subr.mxu0 0.0
    %700 = vmatpush2.msra.mxu0 0.0
    %701 = vmatprep.subr.mxu0 0.0
    %702 = vmatpush2.msra.mxu0 0.0
    %703 = vmatprep.subr.mxu0 0.0
    %704 = vmatpush2.msra.mxu0 0.0
    %705 = vmatprep.subr.mxu0 0.0
    %706 = vmatpush2.msra.mxu0 0.0
    %707 = vmatprep.subr.mxu0 0.0
    %708 = vmatpush2.msra.mxu0 0.0
    %709 = vmatprep.subr.mxu0 0.0
    %710 = vmatpush2.msra.mxu0 0.0
    %711 = vmatprep.subr.mxu0 0.0
    %712 = vmatpush2.msra.mxu0 0.0
    %713 = vmatprep.subr.mxu0 0.0
    %714 = vmatpush2.msra.mxu0 0.0
    %715 = vmatprep.subr.mxu0 0.0
    %716 = vmatpush2.msra.mxu0 0.0
    %717 = vmatprep.subr.mxu0 0.0
    %718 = vmatpush2.msra.mxu0 0.0
    %719 = vmatprep.subr.mxu0 0.0
    %720 = vmatpush2.msra.mxu0 0.0
    %721 = vmatprep.subr.mxu0 0.0
    %722 = vmatpush2.msra.mxu0 0.0
    %723 = vmatprep.subr.mxu0 0.0
    %724 = vmatpush2.msra.mxu0 0.0
    %725 = vmatprep.subr.mxu0 0.0
    %726 = vmatpush2.msra.mxu0 0.0
    %727 = vmatprep.subr.mxu0 0.0
    %728 = vmatpush2.msra.mxu0 0.0
    %729 = vmatprep.subr.mxu0 0.0
    %730 = vmatpush2.msra.mxu0 0.0
    %731 = vmatprep.mubr.f32.mxu0 0.0
    %732 = vmatmul.mubr.f32.gmra.mxu0 %v665
    %v733 = vpop.f32.mrf.mxu0
    %v734 = vadd.f32 0.0, %v733
    %v735 = vpop.f32.mrf.mxu0
    %v736 = vadd.f32 0.0, %v735
    %737 = vdwg.mxu0
    %738 = vmatprep.subr.mxu0 %v463
    %739 = vmatpush1.msra.mxu0 %v462
    %740 = vmatprep.subr.mxu0 %v459
    %741 = vmatpush1.msra.mxu0 %v458
    %742 = vmatprep.subr.mxu0 %v455
    %743 = vmatpush1.msra.mxu0 %v454
    %744 = vmatprep.subr.mxu0 %v451
    %745 = vmatpush1.msra.mxu0 %v450
    %746 = vmatprep.subr.mxu0 %v447
    %747 = vmatpush1.msra.mxu0 %v446
    %748 = vmatprep.subr.mxu0 %v443
    %749 = vmatpush1.msra.mxu0 %v442
    %750 = vmatprep.subr.mxu0 %v439
    %751 = vmatpush1.msra.mxu0 %v438
    %752 = vmatprep.subr.mxu0 %v435
    %753 = vmatpush1.msra.mxu0 %v434
    %754 = vmatprep.subr.mxu0 %v431
    %755 = vmatpush1.msra.mxu0 %v430
    %756 = vmatprep.subr.mxu0 %v427
    %757 = vmatpush1.msra.mxu0 %v426
    %758 = vmatprep.subr.mxu0 %v423
    %759 = vmatpush1.msra.mxu0 %v422
    %760 = vmatprep.subr.mxu0 %v419
    %761 = vmatpush1.msra.mxu0 %v418
    %762 = vmatprep.subr.mxu0 %v415
    %763 = vmatpush1.msra.mxu0 %v414
    %764 = vmatprep.subr.mxu0 %v411
    %765 = vmatpush1.msra.mxu0 %v410
    %766 = vmatprep.subr.mxu0 %v407
    %767 = vmatpush1.msra.mxu0 %v406
    %768 = vmatprep.subr.mxu0 %v403
    %769 = vmatpush1.msra.mxu0 %v402
    %770 = vmatprep.subr.mxu0 0.0
    %771 = vmatpush2.msra.mxu0 0.0
    %772 = vmatprep.subr.mxu0 0.0
    %773 = vmatpush2.msra.mxu0 0.0
    %774 = vmatprep.subr.mxu0 0.0
    %775 = vmatpush2.msra.mxu0 0.0
    %776 = vmatprep.subr.mxu0 0.0
    %777 = vmatpush2.msra.mxu0 0.0
    %778 = vmatprep.subr.mxu0 0.0
    %779 = vmatpush2.msra.mxu0 0.0
    %780 = vmatprep.subr.mxu0 0.0
    %781 = vmatpush2.msra.mxu0 0.0
    %782 = vmatprep.subr.mxu0 0.0
    %783 = vmatpush2.msra.mxu0 0.0
    %784 = vmatprep.subr.mxu0 0.0
    %785 = vmatpush2.msra.mxu0 0.0
    %786 = vmatprep.subr.mxu0 0.0
    %787 = vmatpush2.msra.mxu0 0.0
    %788 = vmatprep.subr.mxu0 0.0
    %789 = vmatpush2.msra.mxu0 0.0
    %790 = vmatprep.subr.mxu0 0.0
    %791 = vmatpush2.msra.mxu0 0.0
    %792 = vmatprep.subr.mxu0 0.0
    %793 = vmatpush2.msra.mxu0 0.0
    %794 = vmatprep.subr.mxu0 0.0
    %795 = vmatpush2.msra.mxu0 0.0
    %796 = vmatprep.subr.mxu0 0.0
    %797 = vmatpush2.msra.mxu0 0.0
    %798 = vmatprep.subr.mxu0 0.0
    %799 = vmatpush2.msra.mxu0 0.0
    %800 = vmatprep.subr.mxu0 0.0
    %801 = vmatpush2.msra.mxu0 0.0
    %802 = vmatprep.mubr.f32.mxu0 0.0
    %803 = vmatmul.mubr.f32.gmra.mxu0 %v665
    %v804 = vpop.f32.mrf.mxu0
    %v805 = vadd.f32 0.0, %v804
    %v806 = vpop.f32.mrf.mxu0
    %v807 = vadd.f32 0.0, %v806
    %808 = vdwg.mxu0
    %v809 = vadd.f32 %v468, %v734
    %v810 = vadd.f32 %v469, %v736
    %v811 = vadd.f32 %v470, %v805
    %v812 = vadd.f32 %v471, %v807
    %v813 = vxor.u32 %v809, 2147483648
    %v814 = vxor.u32 %v810, 2147483648
    %v815 = vmul.f32 %v813, 1.442695
    %v816 = vpow.pop %v815
    %v817 = vmul.f32 %v814, 1.442695
    %v818 = vpow.pop %v817
    %v819 = vadd.f32 %v816, 1.0
    %v820 = vadd.f32 %v818, 1.0
    %v821 = vrcp.pop %v819
    %v822 = vmul.f32 1.0, %v821
    %v823 = vrcp.pop %v820
    %v824 = vmul.f32 1.0, %v823
    %v825 = vtanh.pop %v811
    %v826 = vxor.u32 %v812, 2147483648
    %v827 = vmul.f32 %v826, 1.442695
    %v828 = vpow.pop %v827
    %v829 = vadd.f32 %v828, 1.0
    %v830 = vrcp.pop %v829
    %v831 = vmul.f32 1.0, %v830
    %v832 = vmul.f32 %v824, %v663
    %v833 = vmul.f32 %v822, %v825
    %v834 = vadd.f32 %v832, %v833
    %v835 = vtanh.pop %v834
    %v836 = vmul.f32 %v831, %v835
    %v837 = vadd.f32 %v666, %v836
    %v838 = vmax.f32 %v665, %v836
    %839 = vmatprep.subr.mxu0 %v461
    %840 = vmatpush1.msra.mxu0 %v460
    %841 = vmatprep.subr.mxu0 %v457
    %842 = vmatpush1.msra.mxu0 %v456
    %843 = vmatprep.subr.mxu0 %v453
    %844 = vmatpush1.msra.mxu0 %v452
    %845 = vmatprep.subr.mxu0 %v449
    %846 = vmatpush1.msra.mxu0 %v448
    %847 = vmatprep.subr.mxu0 %v445
    %848 = vmatpush1.msra.mxu0 %v444
    %849 = vmatprep.subr.mxu0 %v441
    %850 = vmatpush1.msra.mxu0 %v440
    %851 = vmatprep.subr.mxu0 %v437
    %852 = vmatpush1.msra.mxu0 %v436
    %853 = vmatprep.subr.mxu0 %v433
    %854 = vmatpush1.msra.mxu0 %v432
    %855 = vmatprep.subr.mxu0 %v429
    %856 = vmatpush1.msra.mxu0 %v428
    %857 = vmatprep.subr.mxu0 %v425
    %858 = vmatpush1.msra.mxu0 %v424
    %859 = vmatprep.subr.mxu0 %v421
    %860 = vmatpush1.msra.mxu0 %v420
    %861 = vmatprep.subr.mxu0 %v417
    %862 = vmatpush1.msra.mxu0 %v416
    %863 = vmatprep.subr.mxu0 %v413
    %864 = vmatpush1.msra.mxu0 %v412
    %865 = vmatprep.subr.mxu0 %v409
    %866 = vmatpush1.msra.mxu0 %v408
    %867 = vmatprep.subr.mxu0 %v405
    %868 = vmatpush1.msra.mxu0 %v404
    %869 = vmatprep.subr.mxu0 %v401
    %870 = vmatpush1.msra.mxu0 %v400
    %871 = vmatprep.subr.mxu0 0.0
    %872 = vmatpush2.msra.mxu0 0.0
    %873 = vmatprep.subr.mxu0 0.0
    %874 = vmatpush2.msra.mxu0 0.0
    %875 = vmatprep.subr.mxu0 0.0
    %876 = vmatpush2.msra.mxu0 0.0
    %877 = vmatprep.subr.mxu0 0.0
    %878 = vmatpush2.msra.mxu0 0.0
    %879 = vmatprep.subr.mxu0 0.0
    %880 = vmatpush2.msra.mxu0 0.0
    %881 = vmatprep.subr.mxu0 0.0
    %882 = vmatpush2.msra.mxu0 0.0
    %883 = vmatprep.subr.mxu0 0.0
    %884 = vmatpush2.msra.mxu0 0.0
    %885 = vmatprep.subr.mxu0 0.0
    %886 = vmatpush2.msra.mxu0 0.0
    %887 = vmatprep.subr.mxu0 0.0
    %888 = vmatpush2.msra.mxu0 0.0
    %889 = vmatprep.subr.mxu0 0.0
    %890 = vmatpush2.msra.mxu0 0.0
    %891 = vmatprep.subr.mxu0 0.0
    %892 = vmatpush2.msra.mxu0 0.0
    %893 = vmatprep.subr.mxu0 0.0
    %894 = vmatpush2.msra.mxu0 0.0
    %895 = vmatprep.subr.mxu0 0.0
    %896 = vmatpush2.msra.mxu0 0.0
    %897 = vmatprep.subr.mxu0 0.0
    %898 = vmatpush2.msra.mxu0 0.0
    %899 = vmatprep.subr.mxu0 0.0
    %900 = vmatpush2.msra.mxu0 0.0
    %901 = vmatprep.subr.mxu0 0.0
    %902 = vmatpush2.msra.mxu0 0.0
    %903 = vmatprep.mubr.f32.mxu0 0.0
    %904 = vmatmul.mubr.f32.gmra.mxu0 %v836
    %v905 = vpop.f32.mrf.mxu0
    %v906 = vadd.f32 0.0, %v905
    %v907 = vpop.f32.mrf.mxu0
    %v908 = vadd.f32 0.0, %v907
    %909 = vdwg.mxu0
    %910 = vmatprep.subr.mxu0 %v463
    %911 = vmatpush1.msra.mxu0 %v462
    %912 = vmatprep.subr.mxu0 %v459
    %913 = vmatpush1.msra.mxu0 %v458
    %914 = vmatprep.subr.mxu0 %v455
    %915 = vmatpush1.msra.mxu0 %v454
    %916 = vmatprep.subr.mxu0 %v451
    %917 = vmatpush1.msra.mxu0 %v450
    %918 = vmatprep.subr.mxu0 %v447
    %919 = vmatpush1.msra.mxu0 %v446
    %920 = vmatprep.subr.mxu0 %v443
    %921 = vmatpush1.msra.mxu0 %v442
    %922 = vmatprep.subr.mxu0 %v439
    %923 = vmatpush1.msra.mxu0 %v438
    %924 = vmatprep.subr.mxu0 %v435
    %925 = vmatpush1.msra.mxu0 %v434
    %926 = vmatprep.subr.mxu0 %v431
    %927 = vmatpush1.msra.mxu0 %v430
    %928 = vmatprep.subr.mxu0 %v427
    %929 = vmatpush1.msra.mxu0 %v426
    %930 = vmatprep.subr.mxu0 %v423
    %931 = vmatpush1.msra.mxu0 %v422
    %932 = vmatprep.subr.mxu0 %v419
    %933 = vmatpush1.msra.mxu0 %v418
    %934 = vmatprep.subr.mxu0 %v415
    %935 = vmatpush1.msra.mxu0 %v414
    %936 = vmatprep.subr.mxu0 %v411
    %937 = vmatpush1.msra.mxu0 %v410
    %938 = vmatprep.subr.mxu0 %v407
    %939 = vmatpush1.msra.mxu0 %v406
    %940 = vmatprep.subr.mxu0 %v403
    %941 = vmatpush1.msra.mxu0 %v402
    %942 = vmatprep.subr.mxu0 0.0
    %943 = vmatpush2.msra.mxu0 0.0
    %944 = vmatprep.subr.mxu0 0.0
    %945 = vmatpush2.msra.mxu0 0.0
    %946 = vmatprep.subr.mxu0 0.0
    %947 = vmatpush2.msra.mxu0 0.0
    %948 = vmatprep.subr.mxu0 0.0
    %949 = vmatpush2.msra.mxu0 0.0
    %950 = vmatprep.subr.mxu0 0.0
    %951 = vmatpush2.msra.mxu0 0.0
    %952 = vmatprep.subr.mxu0 0.0
    %953 = vmatpush2.msra.mxu0 0.0
    %954 = vmatprep.subr.mxu0 0.0
    %955 = vmatpush2.msra.mxu0 0.0
    %956 = vmatprep.subr.mxu0 0.0
    %957 = vmatpush2.msra.mxu0 0.0
    %958 = vmatprep.subr.mxu0 0.0
    %959 = vmatpush2.msra.mxu0 0.0
    %960 = vmatprep.subr.mxu0 0.0
    %961 = vmatpush2.msra.mxu0 0.0
    %962 = vmatprep.subr.mxu0 0.0
    %963 = vmatpush2.msra.mxu0 0.0
    %964 = vmatprep.subr.mxu0 0.0
    %965 = vmatpush2.msra.mxu0 0.0
    %966 = vmatprep.subr.mxu0 0.0
    %967 = vmatpush2.msra.mxu0 0.0
    %968 = vmatprep.subr.mxu0 0.0
    %969 = vmatpush2.msra.mxu0 0.0
    %970 = vmatprep.subr.mxu0 0.0
    %971 = vmatpush2.msra.mxu0 0.0
    %972 = vmatprep.subr.mxu0 0.0
    %973 = vmatpush2.msra.mxu0 0.0
    %974 = vmatprep.mubr.f32.mxu0 0.0
    %975 = vmatmul.mubr.f32.gmra.mxu0 %v836
    %v976 = vpop.f32.mrf.mxu0
    %v977 = vadd.f32 0.0, %v976
    %v978 = vpop.f32.mrf.mxu0
    %v979 = vadd.f32 0.0, %v978
    %980 = vdwg.mxu0
    %v981 = vadd.f32 %v472, %v906
    %v982 = vadd.f32 %v473, %v908
    %v983 = vadd.f32 %v474, %v977
    %v984 = vadd.f32 %v475, %v979
    %v985 = vxor.u32 %v981, 2147483648
    %v986 = vxor.u32 %v982, 2147483648
    %v987 = vmul.f32 %v985, 1.442695
    %v988 = vpow.pop %v987
    %v989 = vmul.f32 %v986, 1.442695
    %v990 = vpow.pop %v989
    %v991 = vadd.f32 %v988, 1.0
    %v992 = vadd.f32 %v990, 1.0
    %v993 = vrcp.pop %v991
    %v994 = vmul.f32 1.0, %v993
    %v995 = vrcp.pop %v992
    %v996 = vmul.f32 1.0, %v995
    %v997 = vtanh.pop %v983
    %v998 = vxor.u32 %v984, 2147483648
    %v999 = vmul.f32 %v998, 1.442695
    %v1000 = vpow.pop %v999
    %v1001 = vadd.f32 %v1000, 1.0
    %v1002 = vrcp.pop %v1001
    %v1003 = vmul.f32 1.0, %v1002
    %v1004 = vmul.f32 %v996, %v834
    %v1005 = vmul.f32 %v994, %v997
    %v1006 = vadd.f32 %v1004, %v1005
    %v1007 = vtanh.pop %v1006
    %v1008 = vmul.f32 %v1003, %v1007
    %v1009 = vadd.f32 %v837, %v1008
    %v1010 = vmax.f32 %v838, %v1008
    %1011 = vmatprep.subr.mxu0 %v461
    %1012 = vmatpush1.msra.mxu0 %v460
    %1013 = vmatprep.subr.mxu0 %v457
    %1014 = vmatpush1.msra.mxu0 %v456
    %1015 = vmatprep.subr.mxu0 %v453
    %1016 = vmatpush1.msra.mxu0 %v452
    %1017 = vmatprep.subr.mxu0 %v449
    %1018 = vmatpush1.msra.mxu0 %v448
    %1019 = vmatprep.subr.mxu0 %v445
    %1020 = vmatpush1.msra.mxu0 %v444
    %1021 = vmatprep.subr.mxu0 %v441
    %1022 = vmatpush1.msra.mxu0 %v440
    %1023 = vmatprep.subr.mxu0 %v437
    %1024 = vmatpush1.msra.mxu0 %v436
    %1025 = vmatprep.subr.mxu0 %v433
    %1026 = vmatpush1.msra.mxu0 %v432
    %1027 = vmatprep.subr.mxu0 %v429
    %1028 = vmatpush1.msra.mxu0 %v428
    %1029 = vmatprep.subr.mxu0 %v425
    %1030 = vmatpush1.msra.mxu0 %v424
    %1031 = vmatprep.subr.mxu0 %v421
    %1032 = vmatpush1.msra.mxu0 %v420
    %1033 = vmatprep.subr.mxu0 %v417
    %1034 = vmatpush1.msra.mxu0 %v416
    %1035 = vmatprep.subr.mxu0 %v413
    %1036 = vmatpush1.msra.mxu0 %v412
    %1037 = vmatprep.subr.mxu0 %v409
    %1038 = vmatpush1.msra.mxu0 %v408
    %1039 = vmatprep.subr.mxu0 %v405
    %1040 = vmatpush1.msra.mxu0 %v404
    %1041 = vmatprep.subr.mxu0 %v401
    %1042 = vmatpush1.msra.mxu0 %v400
    %1043 = vmatprep.subr.mxu0 0.0
    %1044 = vmatpush2.msra.mxu0 0.0
    %1045 = vmatprep.subr.mxu0 0.0
    %1046 = vmatpush2.msra.mxu0 0.0
    %1047 = vmatprep.subr.mxu0 0.0
    %1048 = vmatpush2.msra.mxu0 0.0
    %1049 = vmatprep.subr.mxu0 0.0
    %1050 = vmatpush2.msra.mxu0 0.0
    %1051 = vmatprep.subr.mxu0 0.0
    %1052 = vmatpush2.msra.mxu0 0.0
    %1053 = vmatprep.subr.mxu0 0.0
    %1054 = vmatpush2.msra.mxu0 0.0
    %1055 = vmatprep.subr.mxu0 0.0
    %1056 = vmatpush2.msra.mxu0 0.0
    %1057 = vmatprep.subr.mxu0 0.0
    %1058 = vmatpush2.msra.mxu0 0.0
    %1059 = vmatprep.subr.mxu0 0.0
    %1060 = vmatpush2.msra.mxu0 0.0
    %1061 = vmatprep.subr.mxu0 0.0
    %1062 = vmatpush2.msra.mxu0 0.0
    %1063 = vmatprep.subr.mxu0 0.0
    %1064 = vmatpush2.msra.mxu0 0.0
    %1065 = vmatprep.subr.mxu0 0.0
    %1066 = vmatpush2.msra.mxu0 0.0
    %1067 = vmatprep.subr.mxu0 0.0
    %1068 = vmatpush2.msra.mxu0 0.0
    %1069 = vmatprep.subr.mxu0 0.0
    %1070 = vmatpush2.msra.mxu0 0.0
    %1071 = vmatprep.subr.mxu0 0.0
    %1072 = vmatpush2.msra.mxu0 0.0
    %1073 = vmatprep.subr.mxu0 0.0
    %1074 = vmatpush2.msra.mxu0 0.0
    %1075 = vmatprep.mubr.f32.mxu0 0.0
    %1076 = vmatmul.mubr.f32.gmra.mxu0 %v1008
    %v1077 = vpop.f32.mrf.mxu0
    %v1078 = vadd.f32 0.0, %v1077
    %v1079 = vpop.f32.mrf.mxu0
    %v1080 = vadd.f32 0.0, %v1079
    %1081 = vdwg.mxu0
    %1082 = vmatprep.subr.mxu0 %v463
    %1083 = vmatpush1.msra.mxu0 %v462
    %1084 = vmatprep.subr.mxu0 %v459
    %1085 = vmatpush1.msra.mxu0 %v458
    %1086 = vmatprep.subr.mxu0 %v455
    %1087 = vmatpush1.msra.mxu0 %v454
    %1088 = vmatprep.subr.mxu0 %v451
    %1089 = vmatpush1.msra.mxu0 %v450
    %1090 = vmatprep.subr.mxu0 %v447
    %1091 = vmatpush1.msra.mxu0 %v446
    %1092 = vmatprep.subr.mxu0 %v443
    %1093 = vmatpush1.msra.mxu0 %v442
    %1094 = vmatprep.subr.mxu0 %v439
    %1095 = vmatpush1.msra.mxu0 %v438
    %1096 = vmatprep.subr.mxu0 %v435
    %1097 = vmatpush1.msra.mxu0 %v434
    %1098 = vmatprep.subr.mxu0 %v431
    %1099 = vmatpush1.msra.mxu0 %v430
    %1100 = vmatprep.subr.mxu0 %v427
    %1101 = vmatpush1.msra.mxu0 %v426
    %1102 = vmatprep.subr.mxu0 %v423
    %1103 = vmatpush1.msra.mxu0 %v422
    %1104 = vmatprep.subr.mxu0 %v419
    %1105 = vmatpush1.msra.mxu0 %v418
    %1106 = vmatprep.subr.mxu0 %v415
    %1107 = vmatpush1.msra.mxu0 %v414
    %1108 = vmatprep.subr.mxu0 %v411
    %1109 = vmatpush1.msra.mxu0 %v410
    %1110 = vmatprep.subr.mxu0 %v407
    %1111 = vmatpush1.msra.mxu0 %v406
    %1112 = vmatprep.subr.mxu0 %v403
    %1113 = vmatpush1.msra.mxu0 %v402
    %1114 = vmatprep.subr.mxu0 0.0
    %1115 = vmatpush2.msra.mxu0 0.0
    %1116 = vmatprep.subr.mxu0 0.0
    %1117 = vmatpush2.msra.mxu0 0.0
    %1118 = vmatprep.subr.mxu0 0.0
    %1119 = vmatpush2.msra.mxu0 0.0
    %1120 = vmatprep.subr.mxu0 0.0
    %1121 = vmatpush2.msra.mxu0 0.0
    %1122 = vmatprep.subr.mxu0 0.0
    %1123 = vmatpush2.msra.mxu0 0.0
    %1124 = vmatprep.subr.mxu0 0.0
    %1125 = vmatpush2.msra.mxu0 0.0
    %1126 = vmatprep.subr.mxu0 0.0
    %1127 = vmatpush2.msra.mxu0 0.0
    %1128 = vmatprep.subr.mxu0 0.0
    %1129 = vmatpush2.msra.mxu0 0.0
    %1130 = vmatprep.subr.mxu0 0.0
    %1131 = vmatpush2.msra.mxu0 0.0
    %1132 = vmatprep.subr.mxu0 0.0
    %1133 = vmatpush2.msra.mxu0 0.0
    %1134 = vmatprep.subr.mxu0 0.0
    %1135 = vmatpush2.msra.mxu0 0.0
    %1136 = vmatprep.subr.mxu0 0.0
    %1137 = vmatpush2.msra.mxu0 0.0
    %1138 = vmatprep.subr.mxu0 0.0
    %1139 = vmatpush2.msra.mxu0 0.0
    %1140 = vmatprep.subr.mxu0 0.0
    %1141 = vmatpush2.msra.mxu0 0.0
    %1142 = vmatprep.subr.mxu0 0.0
    %1143 = vmatpush2.msra.mxu0 0.0
    %1144 = vmatprep.subr.mxu0 0.0
    %1145 = vmatpush2.msra.mxu0 0.0
    %1146 = vmatprep.mubr.f32.mxu0 0.0
    %1147 = vmatmul.mubr.f32.gmra.mxu0 %v1008
    %v1148 = vpop.f32.mrf.mxu0
    %v1149 = vadd.f32 0.0, %v1148
    %v1150 = vpop.f32.mrf.mxu0
    %v1151 = vadd.f32 0.0, %v1150
    %1152 = vdwg.mxu0
    %v1153 = vadd.f32 %v476, %v1078
    %v1154 = vadd.f32 %v477, %v1080
    %v1155 = vadd.f32 %v478, %v1149
    %v1156 = vadd.f32 %v479, %v1151
    %v1157 = vxor.u32 %v1153, 2147483648
    %v1158 = vxor.u32 %v1154, 2147483648
    %v1159 = vmul.f32 %v1157, 1.442695
    %v1160 = vpow.pop %v1159
    %v1161 = vmul.f32 %v1158, 1.442695
    %v1162 = vpow.pop %v1161
    %v1163 = vadd.f32 %v1160, 1.0
    %v1164 = vadd.f32 %v1162, 1.0
    %v1165 = vrcp.pop %v1163
    %v1166 = vmul.f32 1.0, %v1165
    %v1167 = vrcp.pop %v1164
    %v1168 = vmul.f32 1.0, %v1167
    %v1169 = vtanh.pop %v1155
    %v1170 = vxor.u32 %v1156, 2147483648
    %v1171 = vmul.f32 %v1170, 1.442695
    %v1172 = vpow.pop %v1171
    %v1173 = vadd.f32 %v1172, 1.0
    %v1174 = vrcp.pop %v1173
    %v1175 = vmul.f32 1.0, %v1174
    %v1176 = vmul.f32 %v1168, %v1006
    %v1177 = vmul.f32 %v1166, %v1169
    %v1178 = vadd.f32 %v1176, %v1177
    %v1179 = vtanh.pop %v1178
    %v1180 = vmul.f32 %v1175, %v1179
    %v1181 = vadd.f32 %v1009, %v1180
    %v1182 = vmax.f32 %v1010, %v1180
    %1183 = vmatprep.subr.mxu0 %v461
    %1184 = vmatpush1.msra.mxu0 %v460
    %1185 = vmatprep.subr.mxu0 %v457
    %1186 = vmatpush1.msra.mxu0 %v456
    %1187 = vmatprep.subr.mxu0 %v453
    %1188 = vmatpush1.msra.mxu0 %v452
    %1189 = vmatprep.subr.mxu0 %v449
    %1190 = vmatpush1.msra.mxu0 %v448
    %1191 = vmatprep.subr.mxu0 %v445
    %1192 = vmatpush1.msra.mxu0 %v444
    %1193 = vmatprep.subr.mxu0 %v441
    %1194 = vmatpush1.msra.mxu0 %v440
    %1195 = vmatprep.subr.mxu0 %v437
    %1196 = vmatpush1.msra.mxu0 %v436
    %1197 = vmatprep.subr.mxu0 %v433
    %1198 = vmatpush1.msra.mxu0 %v432
    %1199 = vmatprep.subr.mxu0 %v429
    %1200 = vmatpush1.msra.mxu0 %v428
    %1201 = vmatprep.subr.mxu0 %v425
    %1202 = vmatpush1.msra.mxu0 %v424
    %1203 = vmatprep.subr.mxu0 %v421
    %1204 = vmatpush1.msra.mxu0 %v420
    %1205 = vmatprep.subr.mxu0 %v417
    %1206 = vmatpush1.msra.mxu0 %v416
    %1207 = vmatprep.subr.mxu0 %v413
    %1208 = vmatpush1.msra.mxu0 %v412
    %1209 = vmatprep.subr.mxu0 %v409
    %1210 = vmatpush1.msra.mxu0 %v408
    %1211 = vmatprep.subr.mxu0 %v405
    %1212 = vmatpush1.msra.mxu0 %v404
    %1213 = vmatprep.subr.mxu0 %v401
    %1214 = vmatpush1.msra.mxu0 %v400
    %1215 = vmatprep.subr.mxu0 0.0
    %1216 = vmatpush2.msra.mxu0 0.0
    %1217 = vmatprep.subr.mxu0 0.0
    %1218 = vmatpush2.msra.mxu0 0.0
    %1219 = vmatprep.subr.mxu0 0.0
    %1220 = vmatpush2.msra.mxu0 0.0
    %1221 = vmatprep.subr.mxu0 0.0
    %1222 = vmatpush2.msra.mxu0 0.0
    %1223 = vmatprep.subr.mxu0 0.0
    %1224 = vmatpush2.msra.mxu0 0.0
    %1225 = vmatprep.subr.mxu0 0.0
    %1226 = vmatpush2.msra.mxu0 0.0
    %1227 = vmatprep.subr.mxu0 0.0
    %1228 = vmatpush2.msra.mxu0 0.0
    %1229 = vmatprep.subr.mxu0 0.0
    %1230 = vmatpush2.msra.mxu0 0.0
    %1231 = vmatprep.subr.mxu0 0.0
    %1232 = vmatpush2.msra.mxu0 0.0
    %1233 = vmatprep.subr.mxu0 0.0
    %1234 = vmatpush2.msra.mxu0 0.0
    %1235 = vmatprep.subr.mxu0 0.0
    %1236 = vmatpush2.msra.mxu0 0.0
    %1237 = vmatprep.subr.mxu0 0.0
    %1238 = vmatpush2.msra.mxu0 0.0
    %1239 = vmatprep.subr.mxu0 0.0
    %1240 = vmatpush2.msra.mxu0 0.0
    %1241 = vmatprep.subr.mxu0 0.0
    %1242 = vmatpush2.msra.mxu0 0.0
    %1243 = vmatprep.subr.mxu0 0.0
    %1244 = vmatpush2.msra.mxu0 0.0
    %1245 = vmatprep.subr.mxu0 0.0
    %1246 = vmatpush2.msra.mxu0 0.0
    %1247 = vmatprep.mubr.f32.mxu0 0.0
    %1248 = vmatmul.mubr.f32.gmra.mxu0 %v1180
    %v1249 = vpop.f32.mrf.mxu0
    %v1250 = vadd.f32 0.0, %v1249
    %v1251 = vpop.f32.mrf.mxu0
    %v1252 = vadd.f32 0.0, %v1251
    %1253 = vdwg.mxu0
    %1254 = vmatprep.subr.mxu0 %v463
    %1255 = vmatpush1.msra.mxu0 %v462
    %1256 = vmatprep.subr.mxu0 %v459
    %1257 = vmatpush1.msra.mxu0 %v458
    %1258 = vmatprep.subr.mxu0 %v455
    %1259 = vmatpush1.msra.mxu0 %v454
    %1260 = vmatprep.subr.mxu0 %v451
    %1261 = vmatpush1.msra.mxu0 %v450
    %1262 = vmatprep.subr.mxu0 %v447
    %1263 = vmatpush1.msra.mxu0 %v446
    %1264 = vmatprep.subr.mxu0 %v443
    %1265 = vmatpush1.msra.mxu0 %v442
    %1266 = vmatprep.subr.mxu0 %v439
    %1267 = vmatpush1.msra.mxu0 %v438
    %1268 = vmatprep.subr.mxu0 %v435
    %1269 = vmatpush1.msra.mxu0 %v434
    %1270 = vmatprep.subr.mxu0 %v431
    %1271 = vmatpush1.msra.mxu0 %v430
    %1272 = vmatprep.subr.mxu0 %v427
    %1273 = vmatpush1.msra.mxu0 %v426
    %1274 = vmatprep.subr.mxu0 %v423
    %1275 = vmatpush1.msra.mxu0 %v422
    %1276 = vmatprep.subr.mxu0 %v419
    %1277 = vmatpush1.msra.mxu0 %v418
    %1278 = vmatprep.subr.mxu0 %v415
    %1279 = vmatpush1.msra.mxu0 %v414
    %1280 = vmatprep.subr.mxu0 %v411
    %1281 = vmatpush1.msra.mxu0 %v410
    %1282 = vmatprep.subr.mxu0 %v407
    %1283 = vmatpush1.msra.mxu0 %v406
    %1284 = vmatprep.subr.mxu0 %v403
    %1285 = vmatpush1.msra.mxu0 %v402
    %1286 = vmatprep.subr.mxu0 0.0
    %1287 = vmatpush2.msra.mxu0 0.0
    %1288 = vmatprep.subr.mxu0 0.0
    %1289 = vmatpush2.msra.mxu0 0.0
    %1290 = vmatprep.subr.mxu0 0.0
    %1291 = vmatpush2.msra.mxu0 0.0
    %1292 = vmatprep.subr.mxu0 0.0
    %1293 = vmatpush2.msra.mxu0 0.0
    %1294 = vmatprep.subr.mxu0 0.0
    %1295 = vmatpush2.msra.mxu0 0.0
    %1296 = vmatprep.subr.mxu0 0.0
    %1297 = vmatpush2.msra.mxu0 0.0
    %1298 = vmatprep.subr.mxu0 0.0
    %1299 = vmatpush2.msra.mxu0 0.0
    %1300 = vmatprep.subr.mxu0 0.0
    %1301 = vmatpush2.msra.mxu0 0.0
    %1302 = vmatprep.subr.mxu0 0.0
    %1303 = vmatpush2.msra.mxu0 0.0
    %1304 = vmatprep.subr.mxu0 0.0
    %1305 = vmatpush2.msra.mxu0 0.0
    %1306 = vmatprep.subr.mxu0 0.0
    %1307 = vmatpush2.msra.mxu0 0.0
    %1308 = vmatprep.subr.mxu0 0.0
    %1309 = vmatpush2.msra.mxu0 0.0
    %1310 = vmatprep.subr.mxu0 0.0
    %1311 = vmatpush2.msra.mxu0 0.0
    %1312 = vmatprep.subr.mxu0 0.0
    %1313 = vmatpush2.msra.mxu0 0.0
    %1314 = vmatprep.subr.mxu0 0.0
    %1315 = vmatpush2.msra.mxu0 0.0
    %1316 = vmatprep.subr.mxu0 0.0
    %1317 = vmatpush2.msra.mxu0 0.0
    %1318 = vmatprep.mubr.f32.mxu0 0.0
    %1319 = vmatmul.mubr.f32.gmra.mxu0 %v1180
    %v1320 = vpop.f32.mrf.mxu0
    %v1321 = vadd.f32 0.0, %v1320
    %v1322 = vpop.f32.mrf.mxu0
    %v1323 = vadd.f32 0.0, %v1322
    %1324 = vdwg.mxu0
    %v1325 = vadd.f32 %v480, %v1250
    %v1326 = vadd.f32 %v481, %v1252
    %v1327 = vadd.f32 %v482, %v1321
    %v1328 = vadd.f32 %v483, %v1323
    %v1329 = vxor.u32 %v1325, 2147483648
    %v1330 = vxor.u32 %v1326, 2147483648
    %v1331 = vmul.f32 %v1329, 1.442695
    %v1332 = vpow.pop %v1331
    %v1333 = vmul.f32 %v1330, 1.442695
    %v1334 = vpow.pop %v1333
    %v1335 = vadd.f32 %v1332, 1.0
    %v1336 = vadd.f32 %v1334, 1.0
    %v1337 = vrcp.pop %v1335
    %v1338 = vmul.f32 1.0, %v1337
    %v1339 = vrcp.pop %v1336
    %v1340 = vmul.f32 1.0, %v1339
    %v1341 = vtanh.pop %v1327
    %v1342 = vxor.u32 %v1328, 2147483648
    %v1343 = vmul.f32 %v1342, 1.442695
    %v1344 = vpow.pop %v1343
    %v1345 = vadd.f32 %v1344, 1.0
    %v1346 = vrcp.pop %v1345
    %v1347 = vmul.f32 1.0, %v1346
    %v1348 = vmul.f32 %v1340, %v1178
    %v1349 = vmul.f32 %v1338, %v1341
    %v1350 = vadd.f32 %v1348, %v1349
    %v1351 = vtanh.pop %v1350
    %v1352 = vmul.f32 %v1347, %v1351
    %v1353 = vadd.f32 %v1181, %v1352
    %v1354 = vmax.f32 %v1182, %v1352
    %1355 = vmatprep.subr.mxu0 %v461
    %1356 = vmatpush1.msra.mxu0 %v460
    %1357 = vmatprep.subr.mxu0 %v457
    %1358 = vmatpush1.msra.mxu0 %v456
    %1359 = vmatprep.subr.mxu0 %v453
    %1360 = vmatpush1.msra.mxu0 %v452
    %1361 = vmatprep.subr.mxu0 %v449
    %1362 = vmatpush1.msra.mxu0 %v448
    %1363 = vmatprep.subr.mxu0 %v445
    %1364 = vmatpush1.msra.mxu0 %v444
    %1365 = vmatprep.subr.mxu0 %v441
    %1366 = vmatpush1.msra.mxu0 %v440
    %1367 = vmatprep.subr.mxu0 %v437
    %1368 = vmatpush1.msra.mxu0 %v436
    %1369 = vmatprep.subr.mxu0 %v433
    %1370 = vmatpush1.msra.mxu0 %v432
    %1371 = vmatprep.subr.mxu0 %v429
    %1372 = vmatpush1.msra.mxu0 %v428
    %1373 = vmatprep.subr.mxu0 %v425
    %1374 = vmatpush1.msra.mxu0 %v424
    %1375 = vmatprep.subr.mxu0 %v421
    %1376 = vmatpush1.msra.mxu0 %v420
    %1377 = vmatprep.subr.mxu0 %v417
    %1378 = vmatpush1.msra.mxu0 %v416
    %1379 = vmatprep.subr.mxu0 %v413
    %1380 = vmatpush1.msra.mxu0 %v412
    %1381 = vmatprep.subr.mxu0 %v409
    %1382 = vmatpush1.msra.mxu0 %v408
    %1383 = vmatprep.subr.mxu0 %v405
    %1384 = vmatpush1.msra.mxu0 %v404
    %1385 = vmatprep.subr.mxu0 %v401
    %1386 = vmatpush1.msra.mxu0 %v400
    %1387 = vmatprep.subr.mxu0 0.0
    %1388 = vmatpush2.msra.mxu0 0.0
    %1389 = vmatprep.subr.mxu0 0.0
    %1390 = vmatpush2.msra.mxu0 0.0
    %1391 = vmatprep.subr.mxu0 0.0
    %1392 = vmatpush2.msra.mxu0 0.0
    %1393 = vmatprep.subr.mxu0 0.0
    %1394 = vmatpush2.msra.mxu0 0.0
    %1395 = vmatprep.subr.mxu0 0.0
    %1396 = vmatpush2.msra.mxu0 0.0
    %1397 = vmatprep.subr.mxu0 0.0
    %1398 = vmatpush2.msra.mxu0 0.0
    %1399 = vmatprep.subr.mxu0 0.0
    %1400 = vmatpush2.msra.mxu0 0.0
    %1401 = vmatprep.subr.mxu0 0.0
    %1402 = vmatpush2.msra.mxu0 0.0
    %1403 = vmatprep.subr.mxu0 0.0
    %1404 = vmatpush2.msra.mxu0 0.0
    %1405 = vmatprep.subr.mxu0 0.0
    %1406 = vmatpush2.msra.mxu0 0.0
    %1407 = vmatprep.subr.mxu0 0.0
    %1408 = vmatpush2.msra.mxu0 0.0
    %1409 = vmatprep.subr.mxu0 0.0
    %1410 = vmatpush2.msra.mxu0 0.0
    %1411 = vmatprep.subr.mxu0 0.0
    %1412 = vmatpush2.msra.mxu0 0.0
    %1413 = vmatprep.subr.mxu0 0.0
    %1414 = vmatpush2.msra.mxu0 0.0
    %1415 = vmatprep.subr.mxu0 0.0
    %1416 = vmatpush2.msra.mxu0 0.0
    %1417 = vmatprep.subr.mxu0 0.0
    %1418 = vmatpush2.msra.mxu0 0.0
    %1419 = vmatprep.mubr.f32.mxu0 0.0
    %1420 = vmatmul.mubr.f32.gmra.mxu0 %v1352
    %v1421 = vpop.f32.mrf.mxu0
    %v1422 = vadd.f32 0.0, %v1421
    %v1423 = vpop.f32.mrf.mxu0
    %v1424 = vadd.f32 0.0, %v1423
    %1425 = vdwg.mxu0
    %1426 = vmatprep.subr.mxu0 %v463
    %1427 = vmatpush1.msra.mxu0 %v462
    %1428 = vmatprep.subr.mxu0 %v459
    %1429 = vmatpush1.msra.mxu0 %v458
    %1430 = vmatprep.subr.mxu0 %v455
    %1431 = vmatpush1.msra.mxu0 %v454
    %1432 = vmatprep.subr.mxu0 %v451
    %1433 = vmatpush1.msra.mxu0 %v450
    %1434 = vmatprep.subr.mxu0 %v447
    %1435 = vmatpush1.msra.mxu0 %v446
    %1436 = vmatprep.subr.mxu0 %v443
    %1437 = vmatpush1.msra.mxu0 %v442
    %1438 = vmatprep.subr.mxu0 %v439
    %1439 = vmatpush1.msra.mxu0 %v438
    %1440 = vmatprep.subr.mxu0 %v435
    %1441 = vmatpush1.msra.mxu0 %v434
    %1442 = vmatprep.subr.mxu0 %v431
    %1443 = vmatpush1.msra.mxu0 %v430
    %1444 = vmatprep.subr.mxu0 %v427
    %1445 = vmatpush1.msra.mxu0 %v426
    %1446 = vmatprep.subr.mxu0 %v423
    %1447 = vmatpush1.msra.mxu0 %v422
    %1448 = vmatprep.subr.mxu0 %v419
    %1449 = vmatpush1.msra.mxu0 %v418
    %1450 = vmatprep.subr.mxu0 %v415
    %1451 = vmatpush1.msra.mxu0 %v414
    %1452 = vmatprep.subr.mxu0 %v411
    %1453 = vmatpush1.msra.mxu0 %v410
    %1454 = vmatprep.subr.mxu0 %v407
    %1455 = vmatpush1.msra.mxu0 %v406
    %1456 = vmatprep.subr.mxu0 %v403
    %1457 = vmatpush1.msra.mxu0 %v402
    %1458 = vmatprep.subr.mxu0 0.0
    %1459 = vmatpush2.msra.mxu0 0.0
    %1460 = vmatprep.subr.mxu0 0.0
    %1461 = vmatpush2.msra.mxu0 0.0
    %1462 = vmatprep.subr.mxu0 0.0
    %1463 = vmatpush2.msra.mxu0 0.0
    %1464 = vmatprep.subr.mxu0 0.0
    %1465 = vmatpush2.msra.mxu0 0.0
    %1466 = vmatprep.subr.mxu0 0.0
    %1467 = vmatpush2.msra.mxu0 0.0
    %1468 = vmatprep.subr.mxu0 0.0
    %1469 = vmatpush2.msra.mxu0 0.0
    %1470 = vmatprep.subr.mxu0 0.0
    %1471 = vmatpush2.msra.mxu0 0.0
    %1472 = vmatprep.subr.mxu0 0.0
    %1473 = vmatpush2.msra.mxu0 0.0
    %1474 = vmatprep.subr.mxu0 0.0
    %1475 = vmatpush2.msra.mxu0 0.0
    %1476 = vmatprep.subr.mxu0 0.0
    %1477 = vmatpush2.msra.mxu0 0.0
    %1478 = vmatprep.subr.mxu0 0.0
    %1479 = vmatpush2.msra.mxu0 0.0
    %1480 = vmatprep.subr.mxu0 0.0
    %1481 = vmatpush2.msra.mxu0 0.0
    %1482 = vmatprep.subr.mxu0 0.0
    %1483 = vmatpush2.msra.mxu0 0.0
    %1484 = vmatprep.subr.mxu0 0.0
    %1485 = vmatpush2.msra.mxu0 0.0
    %1486 = vmatprep.subr.mxu0 0.0
    %1487 = vmatpush2.msra.mxu0 0.0
    %1488 = vmatprep.subr.mxu0 0.0
    %1489 = vmatpush2.msra.mxu0 0.0
    %1490 = vmatprep.mubr.f32.mxu0 0.0
    %1491 = vmatmul.mubr.f32.gmra.mxu0 %v1352
    %v1492 = vpop.f32.mrf.mxu0
    %v1493 = vadd.f32 0.0, %v1492
    %v1494 = vpop.f32.mrf.mxu0
    %v1495 = vadd.f32 0.0, %v1494
    %1496 = vdwg.mxu0
    %v1497 = vadd.f32 %v484, %v1422
    %v1498 = vadd.f32 %v485, %v1424
    %v1499 = vadd.f32 %v486, %v1493
    %v1500 = vadd.f32 %v487, %v1495
    %v1501 = vxor.u32 %v1497, 2147483648
    %v1502 = vxor.u32 %v1498, 2147483648
    %v1503 = vmul.f32 %v1501, 1.442695
    %v1504 = vpow.pop %v1503
    %v1505 = vmul.f32 %v1502, 1.442695
    %v1506 = vpow.pop %v1505
    %v1507 = vadd.f32 %v1504, 1.0
    %v1508 = vadd.f32 %v1506, 1.0
    %v1509 = vrcp.pop %v1507
    %v1510 = vmul.f32 1.0, %v1509
    %v1511 = vrcp.pop %v1508
    %v1512 = vmul.f32 1.0, %v1511
    %v1513 = vtanh.pop %v1499
    %v1514 = vxor.u32 %v1500, 2147483648
    %v1515 = vmul.f32 %v1514, 1.442695
    %v1516 = vpow.pop %v1515
    %v1517 = vadd.f32 %v1516, 1.0
    %v1518 = vrcp.pop %v1517
    %v1519 = vmul.f32 1.0, %v1518
    %v1520 = vmul.f32 %v1512, %v1350
    %v1521 = vmul.f32 %v1510, %v1513
    %v1522 = vadd.f32 %v1520, %v1521
    %v1523 = vtanh.pop %v1522
    %v1524 = vmul.f32 %v1519, %v1523
    %v1525 = vadd.f32 %v1353, %v1524
    %v1526 = vmax.f32 %v1354, %v1524
    %1527 = vmatprep.subr.mxu0 %v461
    %1528 = vmatpush1.msra.mxu0 %v460
    %1529 = vmatprep.subr.mxu0 %v457
    %1530 = vmatpush1.msra.mxu0 %v456
    %1531 = vmatprep.subr.mxu0 %v453
    %1532 = vmatpush1.msra.mxu0 %v452
    %1533 = vmatprep.subr.mxu0 %v449
    %1534 = vmatpush1.msra.mxu0 %v448
    %1535 = vmatprep.subr.mxu0 %v445
    %1536 = vmatpush1.msra.mxu0 %v444
    %1537 = vmatprep.subr.mxu0 %v441
    %1538 = vmatpush1.msra.mxu0 %v440
    %1539 = vmatprep.subr.mxu0 %v437
    %1540 = vmatpush1.msra.mxu0 %v436
    %1541 = vmatprep.subr.mxu0 %v433
    %1542 = vmatpush1.msra.mxu0 %v432
    %1543 = vmatprep.subr.mxu0 %v429
    %1544 = vmatpush1.msra.mxu0 %v428
    %1545 = vmatprep.subr.mxu0 %v425
    %1546 = vmatpush1.msra.mxu0 %v424
    %1547 = vmatprep.subr.mxu0 %v421
    %1548 = vmatpush1.msra.mxu0 %v420
    %1549 = vmatprep.subr.mxu0 %v417
    %1550 = vmatpush1.msra.mxu0 %v416
    %1551 = vmatprep.subr.mxu0 %v413
    %1552 = vmatpush1.msra.mxu0 %v412
    %1553 = vmatprep.subr.mxu0 %v409
    %1554 = vmatpush1.msra.mxu0 %v408
    %1555 = vmatprep.subr.mxu0 %v405
    %1556 = vmatpush1.msra.mxu0 %v404
    %1557 = vmatprep.subr.mxu0 %v401
    %1558 = vmatpush1.msra.mxu0 %v400
    %1559 = vmatprep.subr.mxu0 0.0
    %1560 = vmatpush2.msra.mxu0 0.0
    %1561 = vmatprep.subr.mxu0 0.0
    %1562 = vmatpush2.msra.mxu0 0.0
    %1563 = vmatprep.subr.mxu0 0.0
    %1564 = vmatpush2.msra.mxu0 0.0
    %1565 = vmatprep.subr.mxu0 0.0
    %1566 = vmatpush2.msra.mxu0 0.0
    %1567 = vmatprep.subr.mxu0 0.0
    %1568 = vmatpush2.msra.mxu0 0.0
    %1569 = vmatprep.subr.mxu0 0.0
    %1570 = vmatpush2.msra.mxu0 0.0
    %1571 = vmatprep.subr.mxu0 0.0
    %1572 = vmatpush2.msra.mxu0 0.0
    %1573 = vmatprep.subr.mxu0 0.0
    %1574 = vmatpush2.msra.mxu0 0.0
    %1575 = vmatprep.subr.mxu0 0.0
    %1576 = vmatpush2.msra.mxu0 0.0
    %1577 = vmatprep.subr.mxu0 0.0
    %1578 = vmatpush2.msra.mxu0 0.0
    %1579 = vmatprep.subr.mxu0 0.0
    %1580 = vmatpush2.msra.mxu0 0.0
    %1581 = vmatprep.subr.mxu0 0.0
    %1582 = vmatpush2.msra.mxu0 0.0
    %1583 = vmatprep.subr.mxu0 0.0
    %1584 = vmatpush2.msra.mxu0 0.0
    %1585 = vmatprep.subr.mxu0 0.0
    %1586 = vmatpush2.msra.mxu0 0.0
    %1587 = vmatprep.subr.mxu0 0.0
    %1588 = vmatpush2.msra.mxu0 0.0
    %1589 = vmatprep.subr.mxu0 0.0
    %1590 = vmatpush2.msra.mxu0 0.0
    %1591 = vmatprep.mubr.f32.mxu0 0.0
    %1592 = vmatmul.mubr.f32.gmra.mxu0 %v1524
    %v1593 = vpop.f32.mrf.mxu0
    %v1594 = vadd.f32 0.0, %v1593
    %v1595 = vpop.f32.mrf.mxu0
    %v1596 = vadd.f32 0.0, %v1595
    %1597 = vdwg.mxu0
    %1598 = vmatprep.subr.mxu0 %v463
    %1599 = vmatpush1.msra.mxu0 %v462
    %1600 = vmatprep.subr.mxu0 %v459
    %1601 = vmatpush1.msra.mxu0 %v458
    %1602 = vmatprep.subr.mxu0 %v455
    %1603 = vmatpush1.msra.mxu0 %v454
    %1604 = vmatprep.subr.mxu0 %v451
    %1605 = vmatpush1.msra.mxu0 %v450
    %1606 = vmatprep.subr.mxu0 %v447
    %1607 = vmatpush1.msra.mxu0 %v446
    %1608 = vmatprep.subr.mxu0 %v443
    %1609 = vmatpush1.msra.mxu0 %v442
    %1610 = vmatprep.subr.mxu0 %v439
    %1611 = vmatpush1.msra.mxu0 %v438
    %1612 = vmatprep.subr.mxu0 %v435
    %1613 = vmatpush1.msra.mxu0 %v434
    %1614 = vmatprep.subr.mxu0 %v431
    %1615 = vmatpush1.msra.mxu0 %v430
    %1616 = vmatprep.subr.mxu0 %v427
    %1617 = vmatpush1.msra.mxu0 %v426
    %1618 = vmatprep.subr.mxu0 %v423
    %1619 = vmatpush1.msra.mxu0 %v422
    %1620 = vmatprep.subr.mxu0 %v419
    %1621 = vmatpush1.msra.mxu0 %v418
    %1622 = vmatprep.subr.mxu0 %v415
    %1623 = vmatpush1.msra.mxu0 %v414
    %1624 = vmatprep.subr.mxu0 %v411
    %1625 = vmatpush1.msra.mxu0 %v410
    %1626 = vmatprep.subr.mxu0 %v407
    %1627 = vmatpush1.msra.mxu0 %v406
    %1628 = vmatprep.subr.mxu0 %v403
    %1629 = vmatpush1.msra.mxu0 %v402
    %1630 = vmatprep.subr.mxu0 0.0
    %1631 = vmatpush2.msra.mxu0 0.0
    %1632 = vmatprep.subr.mxu0 0.0
    %1633 = vmatpush2.msra.mxu0 0.0
    %1634 = vmatprep.subr.mxu0 0.0
    %1635 = vmatpush2.msra.mxu0 0.0
    %1636 = vmatprep.subr.mxu0 0.0
    %1637 = vmatpush2.msra.mxu0 0.0
    %1638 = vmatprep.subr.mxu0 0.0
    %1639 = vmatpush2.msra.mxu0 0.0
    %1640 = vmatprep.subr.mxu0 0.0
    %1641 = vmatpush2.msra.mxu0 0.0
    %1642 = vmatprep.subr.mxu0 0.0
    %1643 = vmatpush2.msra.mxu0 0.0
    %1644 = vmatprep.subr.mxu0 0.0
    %1645 = vmatpush2.msra.mxu0 0.0
    %1646 = vmatprep.subr.mxu0 0.0
    %1647 = vmatpush2.msra.mxu0 0.0
    %1648 = vmatprep.subr.mxu0 0.0
    %1649 = vmatpush2.msra.mxu0 0.0
    %1650 = vmatprep.subr.mxu0 0.0
    %1651 = vmatpush2.msra.mxu0 0.0
    %1652 = vmatprep.subr.mxu0 0.0
    %1653 = vmatpush2.msra.mxu0 0.0
    %1654 = vmatprep.subr.mxu0 0.0
    %1655 = vmatpush2.msra.mxu0 0.0
    %1656 = vmatprep.subr.mxu0 0.0
    %1657 = vmatpush2.msra.mxu0 0.0
    %1658 = vmatprep.subr.mxu0 0.0
    %1659 = vmatpush2.msra.mxu0 0.0
    %1660 = vmatprep.subr.mxu0 0.0
    %1661 = vmatpush2.msra.mxu0 0.0
    %1662 = vmatprep.mubr.f32.mxu0 0.0
    %1663 = vmatmul.mubr.f32.gmra.mxu0 %v1524
    %v1664 = vpop.f32.mrf.mxu0
    %v1665 = vadd.f32 0.0, %v1664
    %v1666 = vpop.f32.mrf.mxu0
    %v1667 = vadd.f32 0.0, %v1666
    %1668 = vdwg.mxu0
    %v1669 = vadd.f32 %v488, %v1594
    %v1670 = vadd.f32 %v489, %v1596
    %v1671 = vadd.f32 %v490, %v1665
    %v1672 = vadd.f32 %v491, %v1667
    %v1673 = vxor.u32 %v1669, 2147483648
    %v1674 = vxor.u32 %v1670, 2147483648
    %v1675 = vmul.f32 %v1673, 1.442695
    %v1676 = vpow.pop %v1675
    %v1677 = vmul.f32 %v1674, 1.442695
    %v1678 = vpow.pop %v1677
    %v1679 = vadd.f32 %v1676, 1.0
    %v1680 = vadd.f32 %v1678, 1.0
    %v1681 = vrcp.pop %v1679
    %v1682 = vmul.f32 1.0, %v1681
    %v1683 = vrcp.pop %v1680
    %v1684 = vmul.f32 1.0, %v1683
    %v1685 = vtanh.pop %v1671
    %v1686 = vxor.u32 %v1672, 2147483648
    %v1687 = vmul.f32 %v1686, 1.442695
    %v1688 = vpow.pop %v1687
    %v1689 = vadd.f32 %v1688, 1.0
    %v1690 = vrcp.pop %v1689
    %v1691 = vmul.f32 1.0, %v1690
    %v1692 = vmul.f32 %v1684, %v1522
    %v1693 = vmul.f32 %v1682, %v1685
    %v1694 = vadd.f32 %v1692, %v1693
    %v1695 = vtanh.pop %v1694
    %v1696 = vmul.f32 %v1691, %v1695
    %v1697 = vadd.f32 %v1525, %v1696
    %v1698 = vmax.f32 %v1526, %v1696
    %1699 = vmatprep.subr.mxu0 %v461
    %1700 = vmatpush1.msra.mxu0 %v460
    %1701 = vmatprep.subr.mxu0 %v457
    %1702 = vmatpush1.msra.mxu0 %v456
    %1703 = vmatprep.subr.mxu0 %v453
    %1704 = vmatpush1.msra.mxu0 %v452
    %1705 = vmatprep.subr.mxu0 %v449
    %1706 = vmatpush1.msra.mxu0 %v448
    %1707 = vmatprep.subr.mxu0 %v445
    %1708 = vmatpush1.msra.mxu0 %v444
    %1709 = vmatprep.subr.mxu0 %v441
    %1710 = vmatpush1.msra.mxu0 %v440
    %1711 = vmatprep.subr.mxu0 %v437
    %1712 = vmatpush1.msra.mxu0 %v436
    %1713 = vmatprep.subr.mxu0 %v433
    %1714 = vmatpush1.msra.mxu0 %v432
    %1715 = vmatprep.subr.mxu0 %v429
    %1716 = vmatpush1.msra.mxu0 %v428
    %1717 = vmatprep.subr.mxu0 %v425
    %1718 = vmatpush1.msra.mxu0 %v424
    %1719 = vmatprep.subr.mxu0 %v421
    %1720 = vmatpush1.msra.mxu0 %v420
    %1721 = vmatprep.subr.mxu0 %v417
    %1722 = vmatpush1.msra.mxu0 %v416
    %1723 = vmatprep.subr.mxu0 %v413
    %1724 = vmatpush1.msra.mxu0 %v412
    %1725 = vmatprep.subr.mxu0 %v409
    %1726 = vmatpush1.msra.mxu0 %v408
    %1727 = vmatprep.subr.mxu0 %v405
    %1728 = vmatpush1.msra.mxu0 %v404
    %1729 = vmatprep.subr.mxu0 %v401
    %1730 = vmatpush1.msra.mxu0 %v400
    %1731 = vmatprep.subr.mxu0 0.0
    %1732 = vmatpush2.msra.mxu0 0.0
    %1733 = vmatprep.subr.mxu0 0.0
    %1734 = vmatpush2.msra.mxu0 0.0
    %1735 = vmatprep.subr.mxu0 0.0
    %1736 = vmatpush2.msra.mxu0 0.0
    %1737 = vmatprep.subr.mxu0 0.0
    %1738 = vmatpush2.msra.mxu0 0.0
    %1739 = vmatprep.subr.mxu0 0.0
    %1740 = vmatpush2.msra.mxu0 0.0
    %1741 = vmatprep.subr.mxu0 0.0
    %1742 = vmatpush2.msra.mxu0 0.0
    %1743 = vmatprep.subr.mxu0 0.0
    %1744 = vmatpush2.msra.mxu0 0.0
    %1745 = vmatprep.subr.mxu0 0.0
    %1746 = vmatpush2.msra.mxu0 0.0
    %1747 = vmatprep.subr.mxu0 0.0
    %1748 = vmatpush2.msra.mxu0 0.0
    %1749 = vmatprep.subr.mxu0 0.0
    %1750 = vmatpush2.msra.mxu0 0.0
    %1751 = vmatprep.subr.mxu0 0.0
    %1752 = vmatpush2.msra.mxu0 0.0
    %1753 = vmatprep.subr.mxu0 0.0
    %1754 = vmatpush2.msra.mxu0 0.0
    %1755 = vmatprep.subr.mxu0 0.0
    %1756 = vmatpush2.msra.mxu0 0.0
    %1757 = vmatprep.subr.mxu0 0.0
    %1758 = vmatpush2.msra.mxu0 0.0
    %1759 = vmatprep.subr.mxu0 0.0
    %1760 = vmatpush2.msra.mxu0 0.0
    %1761 = vmatprep.subr.mxu0 0.0
    %1762 = vmatpush2.msra.mxu0 0.0
    %1763 = vmatprep.mubr.f32.mxu0 0.0
    %1764 = vmatmul.mubr.f32.gmra.mxu0 %v1696
    %v1765 = vpop.f32.mrf.mxu0
    %v1766 = vadd.f32 0.0, %v1765
    %v1767 = vpop.f32.mrf.mxu0
    %v1768 = vadd.f32 0.0, %v1767
    %1769 = vdwg.mxu0
    %1770 = vmatprep.subr.mxu0 %v463
    %1771 = vmatpush1.msra.mxu0 %v462
    %1772 = vmatprep.subr.mxu0 %v459
    %1773 = vmatpush1.msra.mxu0 %v458
    %1774 = vmatprep.subr.mxu0 %v455
    %1775 = vmatpush1.msra.mxu0 %v454
    %1776 = vmatprep.subr.mxu0 %v451
    %1777 = vmatpush1.msra.mxu0 %v450
    %1778 = vmatprep.subr.mxu0 %v447
    %1779 = vmatpush1.msra.mxu0 %v446
    %1780 = vmatprep.subr.mxu0 %v443
    %1781 = vmatpush1.msra.mxu0 %v442
    %1782 = vmatprep.subr.mxu0 %v439
    %1783 = vmatpush1.msra.mxu0 %v438
    %1784 = vmatprep.subr.mxu0 %v435
    %1785 = vmatpush1.msra.mxu0 %v434
    %1786 = vmatprep.subr.mxu0 %v431
    %1787 = vmatpush1.msra.mxu0 %v430
    %1788 = vmatprep.subr.mxu0 %v427
    %1789 = vmatpush1.msra.mxu0 %v426
    %1790 = vmatprep.subr.mxu0 %v423
    %1791 = vmatpush1.msra.mxu0 %v422
    %1792 = vmatprep.subr.mxu0 %v419
    %1793 = vmatpush1.msra.mxu0 %v418
    %1794 = vmatprep.subr.mxu0 %v415
    %1795 = vmatpush1.msra.mxu0 %v414
    %1796 = vmatprep.subr.mxu0 %v411
    %1797 = vmatpush1.msra.mxu0 %v410
    %1798 = vmatprep.subr.mxu0 %v407
    %1799 = vmatpush1.msra.mxu0 %v406
    %1800 = vmatprep.subr.mxu0 %v403
    %1801 = vmatpush1.msra.mxu0 %v402
    %1802 = vmatprep.subr.mxu0 0.0
    %1803 = vmatpush2.msra.mxu0 0.0
    %1804 = vmatprep.subr.mxu0 0.0
    %1805 = vmatpush2.msra.mxu0 0.0
    %1806 = vmatprep.subr.mxu0 0.0
    %1807 = vmatpush2.msra.mxu0 0.0
    %1808 = vmatprep.subr.mxu0 0.0
    %1809 = vmatpush2.msra.mxu0 0.0
    %1810 = vmatprep.subr.mxu0 0.0
    %1811 = vmatpush2.msra.mxu0 0.0
    %1812 = vmatprep.subr.mxu0 0.0
    %1813 = vmatpush2.msra.mxu0 0.0
    %1814 = vmatprep.subr.mxu0 0.0
    %1815 = vmatpush2.msra.mxu0 0.0
    %1816 = vmatprep.subr.mxu0 0.0
    %1817 = vmatpush2.msra.mxu0 0.0
    %1818 = vmatprep.subr.mxu0 0.0
    %1819 = vmatpush2.msra.mxu0 0.0
    %1820 = vmatprep.subr.mxu0 0.0
    %1821 = vmatpush2.msra.mxu0 0.0
    %1822 = vmatprep.subr.mxu0 0.0
    %1823 = vmatpush2.msra.mxu0 0.0
    %1824 = vmatprep.subr.mxu0 0.0
    %1825 = vmatpush2.msra.mxu0 0.0
    %1826 = vmatprep.subr.mxu0 0.0
    %1827 = vmatpush2.msra.mxu0 0.0
    %1828 = vmatprep.subr.mxu0 0.0
    %1829 = vmatpush2.msra.mxu0 0.0
    %1830 = vmatprep.subr.mxu0 0.0
    %1831 = vmatpush2.msra.mxu0 0.0
    %1832 = vmatprep.subr.mxu0 0.0
    %1833 = vmatpush2.msra.mxu0 0.0
    %1834 = vmatprep.mubr.f32.mxu0 0.0
    %1835 = vmatmul.mubr.f32.gmra.mxu0 %v1696
    %v1836 = vpop.f32.mrf.mxu0
    %v1837 = vadd.f32 0.0, %v1836
    %v1838 = vpop.f32.mrf.mxu0
    %v1839 = vadd.f32 0.0, %v1838
    %1840 = vdwg.mxu0
    %v1841 = vadd.f32 %v492, %v1766
    %v1842 = vadd.f32 %v493, %v1768
    %v1843 = vadd.f32 %v494, %v1837
    %v1844 = vadd.f32 %v495, %v1839
    %v1845 = vxor.u32 %v1841, 2147483648
    %v1846 = vxor.u32 %v1842, 2147483648
    %v1847 = vmul.f32 %v1845, 1.442695
    %v1848 = vpow.pop %v1847
    %v1849 = vmul.f32 %v1846, 1.442695
    %v1850 = vpow.pop %v1849
    %v1851 = vadd.f32 %v1848, 1.0
    %v1852 = vadd.f32 %v1850, 1.0
    %v1853 = vrcp.pop %v1851
    %v1854 = vmul.f32 1.0, %v1853
    %v1855 = vrcp.pop %v1852
    %v1856 = vmul.f32 1.0, %v1855
    %v1857 = vtanh.pop %v1843
    %v1858 = vxor.u32 %v1844, 2147483648
    %v1859 = vmul.f32 %v1858, 1.442695
    %v1860 = vpow.pop %v1859
    %v1861 = vadd.f32 %v1860, 1.0
    %v1862 = vrcp.pop %v1861
    %v1863 = vmul.f32 1.0, %v1862
    %v1864 = vmul.f32 %v1856, %v1694
    %v1865 = vmul.f32 %v1854, %v1857
    %v1866 = vadd.f32 %v1864, %v1865
    %v1867 = vtanh.pop %v1866
    %v1868 = vmul.f32 %v1863, %v1867
    %v1869 = vadd.f32 %v1697, %v1868
    %v1870 = vmax.f32 %v1698, %v1868
    %v1871 = vld [vmem:[%s4] sm:$0xff]
    %v1872 = vld [vmem:[%s4 + $0x8] sm:$0xff]
    %v1873 = vld [vmem:[%s4 + $0x10] sm:$0xff]
    %v1874 = vld [vmem:[%s4 + $0x18] sm:$0xff]
    %v1875 = vld [vmem:[%s4 + $0x20] sm:$0xff]
    %v1876 = vld [vmem:[%s4 + $0x28] sm:$0xff]
    %v1877 = vld [vmem:[%s4 + $0x30] sm:$0xff]
    %v1878 = vld [vmem:[%s4 + $0x38] sm:$0xff]
    %v1879 = vld [vmem:[%s4 + $0x40] sm:$0xff]
    %v1880 = vld [vmem:[%s4 + $0x48] sm:$0xff]
    %v1881 = vld [vmem:[%s4 + $0x50] sm:$0xff]
    %v1882 = vld [vmem:[%s4 + $0x58] sm:$0xff]
    %v1883 = vld [vmem:[%s4 + $0x60] sm:$0xff]
    %v1884 = vld [vmem:[%s4 + $0x68] sm:$0xff]
    %v1885 = vld [vmem:[%s4 + $0x70] sm:$0xff]
    %v1886 = vld [vmem:[%s4 + $0x78] sm:$0xff]
    %v1887 = vld [vmem:[%s5] sm:$0xff]
    %v1888 = vld [vmem:[%s5 + $0x8] sm:$0xff]
    %v1889 = vld [vmem:[%s5 + $0x10] sm:$0xff]
    %v1890 = vld [vmem:[%s5 + $0x18] sm:$0xff]
    %v1891 = vld [vmem:[%s5 + $0x20] sm:$0xff]
    %v1892 = vld [vmem:[%s5 + $0x28] sm:$0xff]
    %v1893 = vld [vmem:[%s5 + $0x30] sm:$0xff]
    %v1894 = vld [vmem:[%s5 + $0x38] sm:$0xff]
    %v1895 = vld [vmem:[%s5 + $0x40] sm:$0xff]
    %v1896 = vld [vmem:[%s5 + $0x48] sm:$0xff]
    %v1897 = vld [vmem:[%s5 + $0x50] sm:$0xff]
    %v1898 = vld [vmem:[%s5 + $0x58] sm:$0xff]
    %v1899 = vld [vmem:[%s5 + $0x60] sm:$0xff]
    %v1900 = vld [vmem:[%s5 + $0x68] sm:$0xff]
    %v1901 = vld [vmem:[%s5 + $0x70] sm:$0xff]
    %v1902 = vld [vmem:[%s5 + $0x78] sm:$0xff]
    %1903 = vmatprep.subr.mxu0 0.0
    %1904 = vmatpush1.msra.mxu0 %v1902
    %1905 = vmatprep.subr.mxu0 0.0
    %1906 = vmatpush1.msra.mxu0 %v1901
    %1907 = vmatprep.subr.mxu0 0.0
    %1908 = vmatpush1.msra.mxu0 %v1900
    %1909 = vmatprep.subr.mxu0 0.0
    %1910 = vmatpush1.msra.mxu0 %v1899
    %1911 = vmatprep.subr.mxu0 0.0
    %1912 = vmatpush1.msra.mxu0 %v1898
    %1913 = vmatprep.subr.mxu0 0.0
    %1914 = vmatpush1.msra.mxu0 %v1897
    %1915 = vmatprep.subr.mxu0 0.0
    %1916 = vmatpush1.msra.mxu0 %v1896
    %1917 = vmatprep.subr.mxu0 0.0
    %1918 = vmatpush1.msra.mxu0 %v1895
    %1919 = vmatprep.subr.mxu0 0.0
    %1920 = vmatpush1.msra.mxu0 %v1894
    %1921 = vmatprep.subr.mxu0 0.0
    %1922 = vmatpush1.msra.mxu0 %v1893
    %1923 = vmatprep.subr.mxu0 0.0
    %1924 = vmatpush1.msra.mxu0 %v1892
    %1925 = vmatprep.subr.mxu0 0.0
    %1926 = vmatpush1.msra.mxu0 %v1891
    %1927 = vmatprep.subr.mxu0 0.0
    %1928 = vmatpush1.msra.mxu0 %v1890
    %1929 = vmatprep.subr.mxu0 0.0
    %1930 = vmatpush1.msra.mxu0 %v1889
    %1931 = vmatprep.subr.mxu0 0.0
    %1932 = vmatpush1.msra.mxu0 %v1888
    %1933 = vmatprep.subr.mxu0 0.0
    %1934 = vmatpush1.msra.mxu0 %v1887
    %1935 = vmatprep.subr.mxu0 0.0
    %1936 = vmatpush2.msra.mxu0 0.0
    %1937 = vmatprep.subr.mxu0 0.0
    %1938 = vmatpush2.msra.mxu0 0.0
    %1939 = vmatprep.subr.mxu0 0.0
    %1940 = vmatpush2.msra.mxu0 0.0
    %1941 = vmatprep.subr.mxu0 0.0
    %1942 = vmatpush2.msra.mxu0 0.0
    %1943 = vmatprep.subr.mxu0 0.0
    %1944 = vmatpush2.msra.mxu0 0.0
    %1945 = vmatprep.subr.mxu0 0.0
    %1946 = vmatpush2.msra.mxu0 0.0
    %1947 = vmatprep.subr.mxu0 0.0
    %1948 = vmatpush2.msra.mxu0 0.0
    %1949 = vmatprep.subr.mxu0 0.0
    %1950 = vmatpush2.msra.mxu0 0.0
    %1951 = vmatprep.subr.mxu0 0.0
    %1952 = vmatpush2.msra.mxu0 0.0
    %1953 = vmatprep.subr.mxu0 0.0
    %1954 = vmatpush2.msra.mxu0 0.0
    %1955 = vmatprep.subr.mxu0 0.0
    %1956 = vmatpush2.msra.mxu0 0.0
    %1957 = vmatprep.subr.mxu0 0.0
    %1958 = vmatpush2.msra.mxu0 0.0
    %1959 = vmatprep.subr.mxu0 0.0
    %1960 = vmatpush2.msra.mxu0 0.0
    %1961 = vmatprep.subr.mxu0 0.0
    %1962 = vmatpush2.msra.mxu0 0.0
    %1963 = vmatprep.subr.mxu0 0.0
    %1964 = vmatpush2.msra.mxu0 0.0
    %1965 = vmatprep.subr.mxu0 0.0
    %1966 = vmatpush2.msra.mxu0 0.0
    %1967 = vmatprep.mubr.f32.mxu0 0.0
    %1968 = vmatmul.mubr.f32.gmra.mxu0 %v1870
    %v1969 = vpop.f32.mrf.mxu0
    %v1970 = vadd.f32 0.0, %v1969
    %v1971 = vpop.f32.mrf.mxu0
    %1972 = vdwg.mxu0
    %1973 = vmatprep.subr.mxu0 0.0
    %1974 = vmatpush1.msra.mxu0 %v1886
    %1975 = vmatprep.subr.mxu0 0.0
    %1976 = vmatpush1.msra.mxu0 %v1885
    %1977 = vmatprep.subr.mxu0 0.0
    %1978 = vmatpush1.msra.mxu0 %v1884
    %1979 = vmatprep.subr.mxu0 0.0
    %1980 = vmatpush1.msra.mxu0 %v1883
    %1981 = vmatprep.subr.mxu0 0.0
    %1982 = vmatpush1.msra.mxu0 %v1882
    %1983 = vmatprep.subr.mxu0 0.0
    %1984 = vmatpush1.msra.mxu0 %v1881
    %1985 = vmatprep.subr.mxu0 0.0
    %1986 = vmatpush1.msra.mxu0 %v1880
    %1987 = vmatprep.subr.mxu0 0.0
    %1988 = vmatpush1.msra.mxu0 %v1879
    %1989 = vmatprep.subr.mxu0 0.0
    %1990 = vmatpush1.msra.mxu0 %v1878
    %1991 = vmatprep.subr.mxu0 0.0
    %1992 = vmatpush1.msra.mxu0 %v1877
    %1993 = vmatprep.subr.mxu0 0.0
    %1994 = vmatpush1.msra.mxu0 %v1876
    %1995 = vmatprep.subr.mxu0 0.0
    %1996 = vmatpush1.msra.mxu0 %v1875
    %1997 = vmatprep.subr.mxu0 0.0
    %1998 = vmatpush1.msra.mxu0 %v1874
    %1999 = vmatprep.subr.mxu0 0.0
    %2000 = vmatpush1.msra.mxu0 %v1873
    %2001 = vmatprep.subr.mxu0 0.0
    %2002 = vmatpush1.msra.mxu0 %v1872
    %2003 = vmatprep.subr.mxu0 0.0
    %2004 = vmatpush1.msra.mxu0 %v1871
    %2005 = vmatprep.subr.mxu0 0.0
    %2006 = vmatpush2.msra.mxu0 0.0
    %2007 = vmatprep.subr.mxu0 0.0
    %2008 = vmatpush2.msra.mxu0 0.0
    %2009 = vmatprep.subr.mxu0 0.0
    %2010 = vmatpush2.msra.mxu0 0.0
    %2011 = vmatprep.subr.mxu0 0.0
    %2012 = vmatpush2.msra.mxu0 0.0
    %2013 = vmatprep.subr.mxu0 0.0
    %2014 = vmatpush2.msra.mxu0 0.0
    %2015 = vmatprep.subr.mxu0 0.0
    %2016 = vmatpush2.msra.mxu0 0.0
    %2017 = vmatprep.subr.mxu0 0.0
    %2018 = vmatpush2.msra.mxu0 0.0
    %2019 = vmatprep.subr.mxu0 0.0
    %2020 = vmatpush2.msra.mxu0 0.0
    %2021 = vmatprep.subr.mxu0 0.0
    %2022 = vmatpush2.msra.mxu0 0.0
    %2023 = vmatprep.subr.mxu0 0.0
    %2024 = vmatpush2.msra.mxu0 0.0
    %2025 = vmatprep.subr.mxu0 0.0
    %2026 = vmatpush2.msra.mxu0 0.0
    %2027 = vmatprep.subr.mxu0 0.0
    %2028 = vmatpush2.msra.mxu0 0.0
    %2029 = vmatprep.subr.mxu0 0.0
    %2030 = vmatpush2.msra.mxu0 0.0
    %2031 = vmatprep.subr.mxu0 0.0
    %2032 = vmatpush2.msra.mxu0 0.0
    %2033 = vmatprep.subr.mxu0 0.0
    %2034 = vmatpush2.msra.mxu0 0.0
    %2035 = vmatprep.subr.mxu0 0.0
    %2036 = vmatpush2.msra.mxu0 0.0
    %2037 = vmatprep.mubr.f32.mxu0 0.0
    %2038 = vmatmul.mubr.f32.gmra.mxu0 %v1869
    %v2039 = vpop.f32.mrf.mxu0
    %v2040 = vadd.f32 %v1970, %v2039
    %v2041 = vpop.f32.mrf.mxu0
    %2042 = vdwg.mxu0
    %v2043 = vld [vmem:[%s6] sm:$0x1]
    %v2045 = vlaneseq
    %v2046 = vshrl.u32 %v2045, 7
    %v2047 = vsub.s32 0, %v2046
    %v2048 = vrot.slane %v2043, %v2047
    %v2050 = vadd.f32 %v2040, %v2048
    %v2051 = vmax.f32 %v2050, 0.0
    %v2052 = vld [vmem:[%s7] sm:$0xff]
    %v2053 = vld [vmem:[%s7 + $0x8] sm:$0xff]
    %v2054 = vld [vmem:[%s7 + $0x10] sm:$0xff]
    %v2055 = vld [vmem:[%s7 + $0x18] sm:$0xff]
    %v2056 = vld [vmem:[%s7 + $0x20] sm:$0xff]
    %v2057 = vld [vmem:[%s7 + $0x28] sm:$0xff]
    %v2058 = vld [vmem:[%s7 + $0x30] sm:$0xff]
    %v2059 = vld [vmem:[%s7 + $0x38] sm:$0xff]
    %v2060 = vld [vmem:[%s8] sm:$0x1]
    %v2062 = vlaneseq
    %v2063 = vshrl.u32 %v2062, 7
    %v2064 = vsub.s32 0, %v2063
    %v2065 = vrot.slane %v2060, %v2064
    %vm2067 = vcmask 523264
    %v2069 = vsel %vm2067, %v2051, 0
    %2071 = vmatprep.subr.mxu0 0.0
    %2072 = vmatpush1.msra.mxu0 0.0
    %2073 = vmatprep.subr.mxu0 0.0
    %2074 = vmatpush1.msra.mxu0 0.0
    %2075 = vmatprep.subr.mxu0 0.0
    %2076 = vmatpush1.msra.mxu0 0.0
    %2077 = vmatprep.subr.mxu0 0.0
    %2078 = vmatpush1.msra.mxu0 0.0
    %2079 = vmatprep.subr.mxu0 0.0
    %2080 = vmatpush1.msra.mxu0 0.0
    %2081 = vmatprep.subr.mxu0 0.0
    %2082 = vmatpush1.msra.mxu0 0.0
    %2083 = vmatprep.subr.mxu0 0.0
    %2084 = vmatpush1.msra.mxu0 0.0
    %2085 = vmatprep.subr.mxu0 0.0
    %2086 = vmatpush1.msra.mxu0 0.0
    %2087 = vmatprep.subr.mxu0 0.0
    %2088 = vmatpush1.msra.mxu0 %v2059
    %2089 = vmatprep.subr.mxu0 0.0
    %2090 = vmatpush1.msra.mxu0 %v2058
    %2091 = vmatprep.subr.mxu0 0.0
    %2092 = vmatpush1.msra.mxu0 %v2057
    %2093 = vmatprep.subr.mxu0 0.0
    %2094 = vmatpush1.msra.mxu0 %v2056
    %2095 = vmatprep.subr.mxu0 0.0
    %2096 = vmatpush1.msra.mxu0 %v2055
    %2097 = vmatprep.subr.mxu0 0.0
    %2098 = vmatpush1.msra.mxu0 %v2054
    %2099 = vmatprep.subr.mxu0 0.0
    %2100 = vmatpush1.msra.mxu0 %v2053
    %2101 = vmatprep.subr.mxu0 0.0
    %2102 = vmatpush1.msra.mxu0 %v2052
    %2103 = vmatprep.subr.mxu0 0.0
    %2104 = vmatpush2.msra.mxu0 0.0
    %2105 = vmatprep.subr.mxu0 0.0
    %2106 = vmatpush2.msra.mxu0 0.0
    %2107 = vmatprep.subr.mxu0 0.0
    %2108 = vmatpush2.msra.mxu0 0.0
    %2109 = vmatprep.subr.mxu0 0.0
    %2110 = vmatpush2.msra.mxu0 0.0
    %2111 = vmatprep.subr.mxu0 0.0
    %2112 = vmatpush2.msra.mxu0 0.0
    %2113 = vmatprep.subr.mxu0 0.0
    %2114 = vmatpush2.msra.mxu0 0.0
    %2115 = vmatprep.subr.mxu0 0.0
    %2116 = vmatpush2.msra.mxu0 0.0
    %2117 = vmatprep.subr.mxu0 0.0
    %2118 = vmatpush2.msra.mxu0 0.0
    %2119 = vmatprep.subr.mxu0 0.0
    %2120 = vmatpush2.msra.mxu0 0.0
    %2121 = vmatprep.subr.mxu0 0.0
    %2122 = vmatpush2.msra.mxu0 0.0
    %2123 = vmatprep.subr.mxu0 0.0
    %2124 = vmatpush2.msra.mxu0 0.0
    %2125 = vmatprep.subr.mxu0 0.0
    %2126 = vmatpush2.msra.mxu0 0.0
    %2127 = vmatprep.subr.mxu0 0.0
    %2128 = vmatpush2.msra.mxu0 0.0
    %2129 = vmatprep.subr.mxu0 0.0
    %2130 = vmatpush2.msra.mxu0 0.0
    %2131 = vmatprep.subr.mxu0 0.0
    %2132 = vmatpush2.msra.mxu0 0.0
    %2133 = vmatprep.subr.mxu0 0.0
    %2134 = vmatpush2.msra.mxu0 0.0
    %2135 = vmatprep.mubr.f32.mxu0 0.0
    %2136 = vmatmul.mubr.f32.gmra.mxu0 %v2069
    %v2137 = vpop.f32.mrf.mxu0
    %v2138 = vadd.f32 %v2065, %v2137
    %v2139 = vpop.f32.mrf.mxu0
    %2140 = vdwg.mxu0
    %vm2141 = vcmask 31744
    %2142 = vst.msk [vmem:[%s9] sm:$0xff] %vm2141, %v2138
    // Predicated region
    $region42: #{tpu_custom_call.1} parent=1 // pred_check
      _
    $region43: #{tpu_custom_call.1} parent=1 // pred_check_branch
      %2144 = sbr.rel (0) target = $region45
    $region44: #{tpu_custom_call.1} parent=1 // pred_region
      _
    $region45: #{tpu_custom_call.1} parent=1 // pred_fallthru
      _
    // Predicated region
    $region46: #{tpu_custom_call.1} parent=1 // pred_check
      _
    $region47: #{tpu_custom_call.1} parent=1 // pred_check_branch
      %2146 = sbr.rel (0) target = $region49
    $region48: #{tpu_custom_call.1} parent=1 // pred_region
      _
    $region49: #{tpu_custom_call.1} parent=1 // pred_fallthru
      _
    %2147 = vsyncpa [#allocation3], 1

</llo_original>
